<compile_context>
chip_gen: v5e
topology: v5e:2x2
jax: 0.10.0
libtpu: 0.0.40
codegen_flags: <defaults>
</compile_context>

<pallas_src>
import functools

import jax
import jax.numpy as jnp
from jax.experimental import pallas as pl
from jax.experimental.pallas import tpu as pltpu


def _round_up(v, m):
    return ((v + m - 1) // m) * m


# ----------------------------------------------------------------------------
# Pallas kernel: fused  relu?(X_tile @ W + b)   (M-tiled, W/bias resident).
# ----------------------------------------------------------------------------
def _matmul_bias_kernel(x_ref, w_ref, b_ref, o_ref, *, apply_relu):
    acc = jnp.dot(x_ref[...], w_ref[...], preferred_element_type=jnp.float32)
    acc = acc + b_ref[...]                       # (1, N) broadcast over rows
    if apply_relu:
        acc = jnp.maximum(acc, 0.0)
    o_ref[...] = acc.astype(o_ref.dtype)


def matmul_bias(x, w, b, *, relu, out_dtype=jnp.float32, tile_m=256,
                compute_dtype=jnp.bfloat16):
    """y = relu?(x @ w + b).  x:(M,K), w:(K,N), b:(N,) -> (M,N) in out_dtype."""
    M, K = x.shape
    Kw, N = w.shape
    assert K == Kw and b.shape == (N,)

    x = x.astype(compute_dtype)                  # bf16 MXU inputs
    w = w.astype(compute_dtype)
    b2 = b.astype(jnp.float32).reshape(1, N)     # bias / accumulate in f32

    # Row tile: multiple of 16 (bf16 sublane packing); shrink for small M so a
    # single step covers everything.  Per-step VMEM footprint stays ~1-4 MB.
    tm = min(tile_m, max(16, _round_up(M, 16)))
    grid_m = pl.cdiv(M, tm)

    cost = pl.CostEstimate(
        flops=2 * M * K * N,
        transcendentals=0,
        bytes_accessed=(M * K * x.dtype.itemsize + K * N * w.dtype.itemsize
                        + N * 4 + M * N * jnp.dtype(out_dtype).itemsize),
    )

    kernel = functools.partial(_matmul_bias_kernel, apply_relu=relu)
    return pl.pallas_call(
        kernel,
        out_shape=jax.ShapeDtypeStruct((M, N), out_dtype),
        grid=(grid_m,),
        in_specs=[
            pl.BlockSpec((tm, K), lambda i: (i, 0)),   # X: new tile per step
            pl.BlockSpec((K, N), lambda i: (0, 0)),    # W: resident across steps
            pl.BlockSpec((1, N), lambda i: (0, 0)),    # bias: resident
        ],
        out_specs=pl.BlockSpec((tm, N), lambda i: (i, 0)),
        compiler_params=pltpu.CompilerParams(
            dimension_semantics=("parallel",)),        # megacore-shardable
        cost_estimate=cost,
    )(x, w, b2)


# ----------------------------------------------------------------------------
# Conv2d (stride s, no padding) as NHWC im2col + Pallas matmul.
# ----------------------------------------------------------------------------
def _im2col_nhwc(x, kh, kw, stride):
    """x: (B, H, W, C) -> patches (B*oh*ow, kh*kw*C), feature order (kh, kw, C)."""
    B, H, W, C = x.shape
    oh = (H - kh) // stride + 1
    ow = (W - kw) // stride + 1
    cols = []
    for i in range(kh):
        for j in range(kw):
            cols.append(x[:, i:i + stride * oh:stride,
                             j:j + stride * ow:stride, :])   # (B, oh, ow, C)
    # TODO(synk): the patch gather could be fused into the Pallas kernel with
    # manual DMA from an HBM-resident input to avoid materializing patches.
    cols = jnp.concatenate(cols, axis=-1)                    # (B, oh, ow, kh*kw*C)
    return cols.reshape(B * oh * ow, kh * kw * C), oh, ow


def conv2d_nhwc(x, wmat, b, k, stride, *, relu, out_dtype=jnp.bfloat16):
    """x NHWC (B,H,W,C), wmat (kh*kw*Cin, Cout), b (Cout,) -> NHWC (B,oh,ow,Cout)."""
    B = x.shape[0]
    cout = wmat.shape[1]
    cols, oh, ow = _im2col_nhwc(x, k, k, stride)
    y = matmul_bias(cols, wmat, b, relu=relu, out_dtype=out_dtype)
    return y.reshape(B, oh, ow, cout)


# ----------------------------------------------------------------------------
# Citic module: parameter init (PyTorch layout), one-time layout prep, forward.
# ----------------------------------------------------------------------------
def _conv_out(h, k, s):
    return (h - k) // s + 1


def feature_size(input_shape):
    c, h, w = input_shape
    h = _conv_out(_conv_out(_conv_out(h, 8, 4), 4, 2), 3, 1)
    w = _conv_out(_conv_out(_conv_out(w, 8, 4), 4, 2), 3, 1)
    return 64 * h * w


def init_params(key, input_shape, num_actions):
    """PyTorch-layout parameters (Conv: (Cout,Cin,kh,kw); Linear: (out,in))."""
    cin = input_shape[0]
    fs = feature_size(input_shape)
    ks = jax.random.split(key, 5)

    def conv_w(k, cout, ci, kh, kw):
        fan_in = ci * kh * kw
        return jax.random.normal(k, (cout, ci, kh, kw), jnp.float32) / jnp.sqrt(fan_in)

    def lin_w(k, out_f, in_f):
        return jax.random.normal(k, (out_f, in_f), jnp.float32) / jnp.sqrt(in_f)

    return {
        "conv1_w": conv_w(ks[0], 32, cin, 8, 8), "conv1_b": jnp.zeros((32,), jnp.float32),
        "conv2_w": conv_w(ks[1], 64, 32, 4, 4),  "conv2_b": jnp.zeros((64,), jnp.float32),
        "conv3_w": conv_w(ks[2], 64, 64, 3, 3),  "conv3_b": jnp.zeros((64,), jnp.float32),
        "lin1_w": lin_w(ks[3], 512, fs),         "lin1_b": jnp.zeros((512,), jnp.float32),
        "lin2_w": lin_w(ks[4], num_actions, 512),
        "lin2_b": jnp.zeros((num_actions,), jnp.float32),
    }


def prepare_params(params, input_shape):
    """One-time conversion from PyTorch layout to kernel-ready layout.

    * Conv weights -> (kh*kw*Cin, Cout) matching the NHWC patch order.
    * linear1 columns permuted from NCHW-flatten order to NHWC-flatten order,
      then transposed to (K, N); linear2 transposed to (K, N).
    * Matmul weights stored bf16 (MXU input dtype); biases remain f32.
    """
    c, h, w = input_shape
    h1, w1 = _conv_out(h, 8, 4), _conv_out(w, 8, 4)
    h2, w2 = _conv_out(h1, 4, 2), _conv_out(w1, 4, 2)
    h3, w3 = _conv_out(h2, 3, 1), _conv_out(w2, 3, 1)

    def conv_wmat(wt):   # (Cout, Cin, kh, kw) -> (kh*kw*Cin, Cout), (kh,kw,Cin) row order
        cout, cin, kh, kw = wt.shape
        return wt.transpose(2, 3, 1, 0).reshape(kh * kw * cin, cout).astype(jnp.bfloat16)

    l1 = params["lin1_w"]                                    # (512, 64*h3*w3), cols in (C,H,W)
    l1 = l1.reshape(512, 64, h3, w3).transpose(0, 2, 3, 1).reshape(512, -1)  # cols -> (H,W,C)
    return {
        "conv1_w": conv_wmat(params["conv1_w"]), "conv1_b": params["conv1_b"],
        "conv2_w": conv_wmat(params["conv2_w"]), "conv2_b": params["conv2_b"],
        "conv3_w": conv_wmat(params["conv3_w"]), "conv3_b": params["conv3_b"],
        "lin1_w": l1.T.astype(jnp.bfloat16),     "lin1_b": params["lin1_b"],
        "lin2_w": params["lin2_w"].T.astype(jnp.bfloat16),
        "lin2_b": params["lin2_b"],
    }


def citic_forward(kparams, x):
    """x: (B, C, H, W) NCHW float32 (PyTorch layout) -> (B, num_actions) f32."""
    x = jnp.transpose(x, (0, 2, 3, 1)).astype(jnp.bfloat16)  # single NCHW->NHWC at entry
    x = conv2d_nhwc(x, kparams["conv1_w"], kparams["conv1_b"], 8, 4, relu=True)
    x = conv2d_nhwc(x, kparams["conv2_w"], kparams["conv2_b"], 4, 2, relu=True)
    x = conv2d_nhwc(x, kparams["conv3_w"], kparams["conv3_b"], 3, 1, relu=True)
    x = x.reshape(x.shape[0], -1)        # NHWC flatten; lin1_w columns pre-permuted to match
    x = matmul_bias(x, kparams["lin1_w"], kparams["lin1_b"], relu=True,
                    out_dtype=jnp.bfloat16)
    x = matmul_bias(x, kparams["lin2_w"], kparams["lin2_b"], relu=False,
                    out_dtype=jnp.float32)
    return x


if __name__ == "__main__":
    key = jax.random.PRNGKey(0)
    kx, kp = jax.random.split(key)

    # Small shapes consistent with the conv stack (8/4 -> 4/2 -> 3/1):
    # 36x36 input -> 8x8 -> 3x3 -> 1x1, feature_size = 64.
    input_shape = (4, 36, 36)
    num_actions = 6
    batch = 2

    x = jax.random.normal(kx, (batch,) + input_shape, dtype=jnp.float32)
    params = init_params(kp, input_shape, num_actions)
    kparams = prepare_params(params, input_shape)

    fwd = jax.jit(citic_forward)
    out = fwd(kparams, x)
    jax.block_until_ready(out)
    assert out.shape == (batch, num_actions), out.shape
    assert out.dtype == jnp.float32
    print("KERNEL_OK")
</pallas_src>

<mosaic_0001>
module attributes {stable_mosaic.version = 11 : i64} {
  func.func @_matmul_bias_kernel(%arg0: i32, %arg1: memref<128x256xbf16, #tpu.memory_space<vmem>>, %arg2: memref<256x32xbf16, #tpu.memory_space<vmem>>, %arg3: memref<1x32xf32, #tpu.memory_space<vmem>>, %arg4: memref<128x32xbf16, #tpu.memory_space<vmem>>) attributes {dimension_semantics = [#tpu.dimension_semantics<parallel>], iteration_bounds = array<i64: 1>, scalar_prefetch = 0 : i64, scratch_operands = 0 : i64, tpu.core_type = #tpu.core_type<tc>, window_params = [{transform_indices = @transform_0, window_bounds = array<i64: 128, 256>}, {pipeline_mode = #tpu.pipeline_mode<synchronous>, transform_indices = @transform_1, window_bounds = array<i64: 256, 32>}, {pipeline_mode = #tpu.pipeline_mode<synchronous>, transform_indices = @transform_2, window_bounds = array<i64: 1, 32>}, {transform_indices = @transform_3, window_bounds = array<i64: 128, 32>}]} {
    %c0 = arith.constant 0 : index
    %c0_0 = arith.constant 0 : index
    %0 = vector.load %arg1[%c0, %c0_0] : memref<128x256xbf16, #tpu.memory_space<vmem>>, vector<128x256xbf16>
    %c0_1 = arith.constant 0 : index
    %c0_2 = arith.constant 0 : index
    %1 = vector.load %arg2[%c0_1, %c0_2] : memref<256x32xbf16, #tpu.memory_space<vmem>>, vector<256x32xbf16>
    %cst = arith.constant dense<0.000000e+00> : vector<128x32xf32>
    %2 = tpu.matmul %0, %1, %cst {dimension_numbers = #tpu.dot_dimension_numbers<[1], [0], [0], [1], [0, 0, 1, 1], [], []>} : vector<128x256xbf16>, vector<256x32xbf16>, vector<128x32xf32> -> vector<128x32xf32>
    %c0_3 = arith.constant 0 : index
    %c0_4 = arith.constant 0 : index
    %3 = vector.load %arg3[%c0_3, %c0_4] : memref<1x32xf32, #tpu.memory_space<vmem>>, vector<1x32xf32>
    %4 = vector.broadcast %3 : vector<1x32xf32> to vector<128x32xf32>
    %5 = arith.addf %2, %4 : vector<128x32xf32>
    %cst_5 = arith.constant 0.000000e+00 : f32
    %6 = vector.broadcast %cst_5 : f32 to vector<128x32xf32>
    %7 = arith.maximumf %5, %6 : vector<128x32xf32>
    %8 = arith.truncf %7 : vector<128x32xf32> to vector<128x32xbf16>
    %c0_6 = arith.constant 0 : index
    %c0_7 = arith.constant 0 : index
    %9 = vector.load %arg4[%c0_6, %c0_7] : memref<128x32xbf16, #tpu.memory_space<vmem>>, vector<128x32xbf16>
    tpu.vector_store %arg4[%c0_6, %c0_7], %8 {strides = array<i32>} : memref<128x32xbf16, #tpu.memory_space<vmem>>, vector<128x32xbf16>,
    return
  }
  func.func @transform_0(%arg0: i32) -> (i32, i32) {
    %c0_i32 = arith.constant 0 : i32
    %c0_i32_0 = arith.constant 0 : i32
    return %arg0, %c0_i32 : i32, i32
  }
  func.func @transform_1(%arg0: i32) -> (i32, i32) {
    %c0_i32 = arith.constant 0 : i32
    %c0_i32_0 = arith.constant 0 : i32
    %c0_i32_1 = arith.constant 0 : i32
    return %c0_i32, %c0_i32_0 : i32, i32
  }
  func.func @transform_2(%arg0: i32) -> (i32, i32) {
    %c0_i32 = arith.constant 0 : i32
    %c0_i32_0 = arith.constant 0 : i32
    %c0_i32_1 = arith.constant 0 : i32
    return %c0_i32, %c0_i32_0 : i32, i32
  }
  func.func @transform_3(%arg0: i32) -> (i32, i32) {
    %c0_i32 = arith.constant 0 : i32
    %c0_i32_0 = arith.constant 0 : i32
    return %arg0, %c0_i32 : i32, i32
  }
}

module attributes {stable_mosaic.version = 11 : i64} {
  func.func @_matmul_bias_kernel(%arg0: i32, %arg1: memref<32x512xbf16, #tpu.memory_space<vmem>>, %arg2: memref<512x64xbf16, #tpu.memory_space<vmem>>, %arg3: memref<1x64xf32, #tpu.memory_space<vmem>>, %arg4: memref<32x64xbf16, #tpu.memory_space<vmem>>) attributes {dimension_semantics = [#tpu.dimension_semantics<parallel>], iteration_bounds = array<i64: 1>, scalar_prefetch = 0 : i64, scratch_operands = 0 : i64, tpu.core_type = #tpu.core_type<tc>, window_params = [{transform_indices = @transform_0, window_bounds = array<i64: 32, 512>}, {pipeline_mode = #tpu.pipeline_mode<synchronous>, transform_indices = @transform_1, window_bounds = array<i64: 512, 64>}, {pipeline_mode = #tpu.pipeline_mode<synchronous>, transform_indices = @transform_2, window_bounds = array<i64: 1, 64>}, {transform_indices = @transform_3, window_bounds = array<i64: 32, 64>}]} {
    %c0 = arith.constant 0 : index
    %c0_0 = arith.constant 0 : index
    %0 = vector.load %arg1[%c0, %c0_0] : memref<32x512xbf16, #tpu.memory_space<vmem>>, vector<32x512xbf16>
    %c0_1 = arith.constant 0 : index
    %c0_2 = arith.constant 0 : index
    %1 = vector.load %arg2[%c0_1, %c0_2] : memref<512x64xbf16, #tpu.memory_space<vmem>>, vector<512x64xbf16>
    %cst = arith.constant dense<0.000000e+00> : vector<32x64xf32>
    %2 = tpu.matmul %0, %1, %cst {dimension_numbers = #tpu.dot_dimension_numbers<[1], [0], [0], [1], [0, 0, 1, 1], [], []>} : vector<32x512xbf16>, vector<512x64xbf16>, vector<32x64xf32> -> vector<32x64xf32>
    %c0_3 = arith.constant 0 : index
    %c0_4 = arith.constant 0 : index
    %3 = vector.load %arg3[%c0_3, %c0_4] : memref<1x64xf32, #tpu.memory_space<vmem>>, vector<1x64xf32>
    %4 = vector.broadcast %3 : vector<1x64xf32> to vector<32x64xf32>
    %5 = arith.addf %2, %4 : vector<32x64xf32>
    %cst_5 = arith.constant 0.000000e+00 : f32
    %6 = vector.broadcast %cst_5 : f32 to vector<32x64xf32>
    %7 = arith.maximumf %5, %6 : vector<32x64xf32>
    %8 = arith.truncf %7 : vector<32x64xf32> to vector<32x64xbf16>
    %c0_6 = arith.constant 0 : index
    %c0_7 = arith.constant 0 : index
    %9 = vector.load %arg4[%c0_6, %c0_7] : memref<32x64xbf16, #tpu.memory_space<vmem>>, vector<32x64xbf16>
    tpu.vector_store %arg4[%c0_6, %c0_7], %8 {strides = array<i32>} : memref<32x64xbf16, #tpu.memory_space<vmem>>, vector<32x64xbf16>,
    return
  }
  func.func @transform_0(%arg0: i32) -> (i32, i32) {
    %c0_i32 = arith.constant 0 : i32
    %c0_i32_0 = arith.constant 0 : i32
    return %arg0, %c0_i32 : i32, i32
  }
  func.func @transform_1(%arg0: i32) -> (i32, i32) {
    %c0_i32 = arith.constant 0 : i32
    %c0_i32_0 = arith.constant 0 : i32
    %c0_i32_1 = arith.constant 0 : i32
    return %c0_i32, %c0_i32_0 : i32, i32
  }
  func.func @transform_2(%arg0: i32) -> (i32, i32) {
    %c0_i32 = arith.constant 0 : i32
    %c0_i32_0 = arith.constant 0 : i32
    %c0_i32_1 = arith.constant 0 : i32
    return %c0_i32, %c0_i32_0 : i32, i32
  }
  func.func @transform_3(%arg0: i32) -> (i32, i32) {
    %c0_i32 = arith.constant 0 : i32
    %c0_i32_0 = arith.constant 0 : i32
    return %arg0, %c0_i32 : i32, i32
  }
}

module attributes {stable_mosaic.version = 11 : i64} {
  func.func @_matmul_bias_kernel(%arg0: i32, %arg1: memref<16x576xbf16, #tpu.memory_space<vmem>>, %arg2: memref<576x64xbf16, #tpu.memory_space<vmem>>, %arg3: memref<1x64xf32, #tpu.memory_space<vmem>>, %arg4: memref<16x64xbf16, #tpu.memory_space<vmem>>) attributes {dimension_semantics = [#tpu.dimension_semantics<parallel>], iteration_bounds = array<i64: 1>, scalar_prefetch = 0 : i64, scratch_operands = 0 : i64, tpu.core_type = #tpu.core_type<tc>, window_params = [{transform_indices = @transform_0, window_bounds = array<i64: 16, 576>}, {pipeline_mode = #tpu.pipeline_mode<synchronous>, transform_indices = @transform_1, window_bounds = array<i64: 576, 64>}, {pipeline_mode = #tpu.pipeline_mode<synchronous>, transform_indices = @transform_2, window_bounds = array<i64: 1, 64>}, {transform_indices = @transform_3, window_bounds = array<i64: 16, 64>}]} {
    %c0 = arith.constant 0 : index
    %c0_0 = arith.constant 0 : index
    %0 = vector.load %arg1[%c0, %c0_0] : memref<16x576xbf16, #tpu.memory_space<vmem>>, vector<16x576xbf16>
    %c0_1 = arith.constant 0 : index
    %c0_2 = arith.constant 0 : index
    %1 = vector.load %arg2[%c0_1, %c0_2] : memref<576x64xbf16, #tpu.memory_space<vmem>>, vector<576x64xbf16>
    %cst = arith.constant dense<0.000000e+00> : vector<16x64xf32>
    %2 = tpu.matmul %0, %1, %cst {dimension_numbers = #tpu.dot_dimension_numbers<[1], [0], [0], [1], [0, 0, 1, 1], [], []>} : vector<16x576xbf16>, vector<576x64xbf16>, vector<16x64xf32> -> vector<16x64xf32>
    %c0_3 = arith.constant 0 : index
    %c0_4 = arith.constant 0 : index
    %3 = vector.load %arg3[%c0_3, %c0_4] : memref<1x64xf32, #tpu.memory_space<vmem>>, vector<1x64xf32>
    %4 = vector.broadcast %3 : vector<1x64xf32> to vector<16x64xf32>
    %5 = arith.addf %2, %4 : vector<16x64xf32>
    %cst_5 = arith.constant 0.000000e+00 : f32
    %6 = vector.broadcast %cst_5 : f32 to vector<16x64xf32>
    %7 = arith.maximumf %5, %6 : vector<16x64xf32>
    %8 = arith.truncf %7 : vector<16x64xf32> to vector<16x64xbf16>
    %c0_6 = arith.constant 0 : index
    %c0_7 = arith.constant 0 : index
    %9 = vector.load %arg4[%c0_6, %c0_7] : memref<16x64xbf16, #tpu.memory_space<vmem>>, vector<16x64xbf16>
    tpu.vector_store %arg4[%c0_6, %c0_7], %8 {strides = array<i32>} : memref<16x64xbf16, #tpu.memory_space<vmem>>, vector<16x64xbf16>,
    return
  }
  func.func @transform_0(%arg0: i32) -> (i32, i32) {
    %c0_i32 = arith.constant 0 : i32
    %c0_i32_0 = arith.constant 0 : i32
    return %arg0, %c0_i32 : i32, i32
  }
  func.func @transform_1(%arg0: i32) -> (i32, i32) {
    %c0_i32 = arith.constant 0 : i32
    %c0_i32_0 = arith.constant 0 : i32
    %c0_i32_1 = arith.constant 0 : i32
    return %c0_i32, %c0_i32_0 : i32, i32
  }
  func.func @transform_2(%arg0: i32) -> (i32, i32) {
    %c0_i32 = arith.constant 0 : i32
    %c0_i32_0 = arith.constant 0 : i32
    %c0_i32_1 = arith.constant 0 : i32
    return %c0_i32, %c0_i32_0 : i32, i32
  }
  func.func @transform_3(%arg0: i32) -> (i32, i32) {
    %c0_i32 = arith.constant 0 : i32
    %c0_i32_0 = arith.constant 0 : i32
    return %arg0, %c0_i32 : i32, i32
  }
}

module attributes {stable_mosaic.version = 11 : i64} {
  func.func @_matmul_bias_kernel(%arg0: i32, %arg1: memref<16x64xbf16, #tpu.memory_space<vmem>>, %arg2: memref<64x512xbf16, #tpu.memory_space<vmem>>, %arg3: memref<1x512xf32, #tpu.memory_space<vmem>>, %arg4: memref<16x512xbf16, #tpu.memory_space<vmem>>) attributes {dimension_semantics = [#tpu.dimension_semantics<parallel>], iteration_bounds = array<i64: 1>, scalar_prefetch = 0 : i64, scratch_operands = 0 : i64, tpu.core_type = #tpu.core_type<tc>, window_params = [{transform_indices = @transform_0, window_bounds = array<i64: 16, 64>}, {pipeline_mode = #tpu.pipeline_mode<synchronous>, transform_indices = @transform_1, window_bounds = array<i64: 64, 512>}, {pipeline_mode = #tpu.pipeline_mode<synchronous>, transform_indices = @transform_2, window_bounds = array<i64: 1, 512>}, {transform_indices = @transform_3, window_bounds = array<i64: 16, 512>}]} {
    %c0 = arith.constant 0 : index
    %c0_0 = arith.constant 0 : index
    %0 = vector.load %arg1[%c0, %c0_0] : memref<16x64xbf16, #tpu.memory_space<vmem>>, vector<16x64xbf16>
    %c0_1 = arith.constant 0 : index
    %c0_2 = arith.constant 0 : index
    %1 = vector.load %arg2[%c0_1, %c0_2] : memref<64x512xbf16, #tpu.memory_space<vmem>>, vector<64x512xbf16>
    %cst = arith.constant dense<0.000000e+00> : vector<16x512xf32>
    %2 = tpu.matmul %0, %1, %cst {dimension_numbers = #tpu.dot_dimension_numbers<[1], [0], [0], [1], [0, 0, 1, 1], [], []>} : vector<16x64xbf16>, vector<64x512xbf16>, vector<16x512xf32> -> vector<16x512xf32>
    %c0_3 = arith.constant 0 : index
    %c0_4 = arith.constant 0 : index
    %3 = vector.load %arg3[%c0_3, %c0_4] : memref<1x512xf32, #tpu.memory_space<vmem>>, vector<1x512xf32>
    %4 = vector.broadcast %3 : vector<1x512xf32> to vector<16x512xf32>
    %5 = arith.addf %2, %4 : vector<16x512xf32>
    %cst_5 = arith.constant 0.000000e+00 : f32
    %6 = vector.broadcast %cst_5 : f32 to vector<16x512xf32>
    %7 = arith.maximumf %5, %6 : vector<16x512xf32>
    %8 = arith.truncf %7 : vector<16x512xf32> to vector<16x512xbf16>
    %c0_6 = arith.constant 0 : index
    %c0_7 = arith.constant 0 : index
    %9 = vector.load %arg4[%c0_6, %c0_7] : memref<16x512xbf16, #tpu.memory_space<vmem>>, vector<16x512xbf16>
    tpu.vector_store %arg4[%c0_6, %c0_7], %8 {strides = array<i32>} : memref<16x512xbf16, #tpu.memory_space<vmem>>, vector<16x512xbf16>,
    return
  }
  func.func @transform_0(%arg0: i32) -> (i32, i32) {
    %c0_i32 = arith.constant 0 : i32
    %c0_i32_0 = arith.constant 0 : i32
    return %arg0, %c0_i32 : i32, i32
  }
  func.func @transform_1(%arg0: i32) -> (i32, i32) {
    %c0_i32 = arith.constant 0 : i32
    %c0_i32_0 = arith.constant 0 : i32
    %c0_i32_1 = arith.constant 0 : i32
    return %c0_i32, %c0_i32_0 : i32, i32
  }
  func.func @transform_2(%arg0: i32) -> (i32, i32) {
    %c0_i32 = arith.constant 0 : i32
    %c0_i32_0 = arith.constant 0 : i32
    %c0_i32_1 = arith.constant 0 : i32
    return %c0_i32, %c0_i32_0 : i32, i32
  }
  func.func @transform_3(%arg0: i32) -> (i32, i32) {
    %c0_i32 = arith.constant 0 : i32
    %c0_i32_0 = arith.constant 0 : i32
    return %arg0, %c0_i32 : i32, i32
  }
}

module attributes {stable_mosaic.version = 11 : i64} {
  func.func @_matmul_bias_kernel(%arg0: i32, %arg1: memref<16x512xbf16, #tpu.memory_space<vmem>>, %arg2: memref<512x6xbf16, #tpu.memory_space<vmem>>, %arg3: memref<1x6xf32, #tpu.memory_space<vmem>>, %arg4: memref<16x6xf32, #tpu.memory_space<vmem>>) attributes {dimension_semantics = [#tpu.dimension_semantics<parallel>], iteration_bounds = array<i64: 1>, scalar_prefetch = 0 : i64, scratch_operands = 0 : i64, tpu.core_type = #tpu.core_type<tc>, window_params = [{transform_indices = @transform_0, window_bounds = array<i64: 16, 512>}, {pipeline_mode = #tpu.pipeline_mode<synchronous>, transform_indices = @transform_1, window_bounds = array<i64: 512, 6>}, {pipeline_mode = #tpu.pipeline_mode<synchronous>, transform_indices = @transform_2, window_bounds = array<i64: 1, 6>}, {transform_indices = @transform_3, window_bounds = array<i64: 16, 6>}]} {
    %c0 = arith.constant 0 : index
    %c0_0 = arith.constant 0 : index
    %0 = vector.load %arg1[%c0, %c0_0] : memref<16x512xbf16, #tpu.memory_space<vmem>>, vector<16x512xbf16>
    %c0_1 = arith.constant 0 : index
    %c0_2 = arith.constant 0 : index
    %1 = vector.load %arg2[%c0_1, %c0_2] : memref<512x6xbf16, #tpu.memory_space<vmem>>, vector<512x6xbf16>
    %cst = arith.constant dense<0.000000e+00> : vector<16x6xf32>
    %2 = tpu.matmul %0, %1, %cst {dimension_numbers = #tpu.dot_dimension_numbers<[1], [0], [0], [1], [0, 0, 1, 1], [], []>} : vector<16x512xbf16>, vector<512x6xbf16>, vector<16x6xf32> -> vector<16x6xf32>
    %c0_3 = arith.constant 0 : index
    %c0_4 = arith.constant 0 : index
    %3 = vector.load %arg3[%c0_3, %c0_4] : memref<1x6xf32, #tpu.memory_space<vmem>>, vector<1x6xf32>
    %4 = vector.broadcast %3 : vector<1x6xf32> to vector<16x6xf32>
    %5 = arith.addf %2, %4 : vector<16x6xf32>
    %c0_5 = arith.constant 0 : index
    %c0_6 = arith.constant 0 : index
    %6 = vector.load %arg4[%c0_5, %c0_6] : memref<16x6xf32, #tpu.memory_space<vmem>>, vector<16x6xf32>
    tpu.vector_store %arg4[%c0_5, %c0_6], %5 {strides = array<i32>} : memref<16x6xf32, #tpu.memory_space<vmem>>, vector<16x6xf32>,
    return
  }
  func.func @transform_0(%arg0: i32) -> (i32, i32) {
    %c0_i32 = arith.constant 0 : i32
    %c0_i32_0 = arith.constant 0 : i32
    return %arg0, %c0_i32 : i32, i32
  }
  func.func @transform_1(%arg0: i32) -> (i32, i32) {
    %c0_i32 = arith.constant 0 : i32
    %c0_i32_0 = arith.constant 0 : i32
    %c0_i32_1 = arith.constant 0 : i32
    return %c0_i32, %c0_i32_0 : i32, i32
  }
  func.func @transform_2(%arg0: i32) -> (i32, i32) {
    %c0_i32 = arith.constant 0 : i32
    %c0_i32_0 = arith.constant 0 : i32
    %c0_i32_1 = arith.constant 0 : i32
    return %c0_i32, %c0_i32_0 : i32, i32
  }
  func.func @transform_3(%arg0: i32) -> (i32, i32) {
    %c0_i32 = arith.constant 0 : i32
    %c0_i32_0 = arith.constant 0 : i32
    return %arg0, %c0_i32 : i32, i32
  }
}

</mosaic_0001>

<llo_original>
// kernel: citic_forward.5
$region0: #{citic_forward.5}
  #allocation0 [shape = 'u32[]', space=smem, size = 0x4, offset = 0x4, fixed_abs, tag = 'smem constant byte address 0x4 - core index']
  #allocation1 [shape = 'u32[72,128]{1,0:T(1,128)}', space=vmem, size = 0x9000, scoped, tag = 'internal scratch']
  %s0 = inlined_call_operand.vmem [shape: bf16[128,256], index: 0, kind: input, shape index: {}]
  %s1 = inlined_call_operand.vmem [shape: bf16[256,32], index: 1, kind: input, shape index: {}]
  %s2 = inlined_call_operand.vmem [shape: f32[1,32], index: 2, kind: input, shape index: {}]
  %s3 = inlined_call_operand.vmem [shape: bf16[128,32], index: 3, kind: output, shape index: {}]
  %s4 = sld [smem:[#allocation0]]
  $region22: #{citic_forward.5} parent=0
    _
  %s6 = ssub.s32 1, %s4
  %s7 = scalar_select 0, %s6, %s4
  // Predicated region
  $region2: #{citic_forward.5} parent=0 // pred_check
    _
  $region3: #{citic_forward.5} parent=0 // pred_check_branch
    %9 = sbr.rel (0) target = $region5
  $region4: #{citic_forward.5} parent=0 // pred_region
    _
  $region5: #{citic_forward.5} parent=0 // pred_fallthru
    _
  // Predicated region
  $region6: #{citic_forward.5} parent=0 // pred_check
    _
  $region7: #{citic_forward.5} parent=0 // pred_check_branch
    %11 = sbr.rel (0) target = $region9
  $region8: #{citic_forward.5} parent=0 // pred_region
    _
  $region9: #{citic_forward.5} parent=0 // pred_fallthru
    _
  // Predicated region
  $region10: #{citic_forward.5} parent=0 // pred_check
    _
  $region11: #{citic_forward.5} parent=0 // pred_check_branch
    %13 = sbr.rel (0) target = $region13
  $region12: #{citic_forward.5} parent=0 // pred_region
    _
  $region13: #{citic_forward.5} parent=0 // pred_fallthru
    _
  %v14 = vld [vmem:[%s0] sm:$0xff]
  %v15 = vld [vmem:[%s0 + $0x8] sm:$0xff]
  %v16 = vld [vmem:[%s0 + $0x10] sm:$0xff]
  %v17 = vld [vmem:[%s0 + $0x18] sm:$0xff]
  %v18 = vld [vmem:[%s0 + $0x20] sm:$0xff]
  %v19 = vld [vmem:[%s0 + $0x28] sm:$0xff]
  %v20 = vld [vmem:[%s0 + $0x30] sm:$0xff]
  %v21 = vld [vmem:[%s0 + $0x38] sm:$0xff]
  %v22 = vld [vmem:[%s0 + $0x40] sm:$0xff]
  %v23 = vld [vmem:[%s0 + $0x48] sm:$0xff]
  %v24 = vld [vmem:[%s0 + $0x50] sm:$0xff]
  %v25 = vld [vmem:[%s0 + $0x58] sm:$0xff]
  %v26 = vld [vmem:[%s0 + $0x60] sm:$0xff]
  %v27 = vld [vmem:[%s0 + $0x68] sm:$0xff]
  %v28 = vld [vmem:[%s0 + $0x70] sm:$0xff]
  %v29 = vld [vmem:[%s0 + $0x78] sm:$0xff]
  %v30 = vld [vmem:[%s1] sm:$0xf]
  %v31 = vld [vmem:[%s1 + $0x4] sm:$0xf]
  %v32 = vld [vmem:[%s1 + $0x8] sm:$0xf]
  %v33 = vld [vmem:[%s1 + $0xc] sm:$0xf]
  %v34 = vld [vmem:[%s1 + $0x10] sm:$0xf]
  %v35 = vld [vmem:[%s1 + $0x14] sm:$0xf]
  %v36 = vld [vmem:[%s1 + $0x18] sm:$0xf]
  %v37 = vld [vmem:[%s1 + $0x1c] sm:$0xf]
  %v38 = vld [vmem:[%s1 + $0x20] sm:$0xf]
  %v39 = vld [vmem:[%s1 + $0x24] sm:$0xf]
  %v40 = vld [vmem:[%s1 + $0x28] sm:$0xf]
  %v41 = vld [vmem:[%s1 + $0x2c] sm:$0xf]
  %v42 = vld [vmem:[%s1 + $0x30] sm:$0xf]
  %v43 = vld [vmem:[%s1 + $0x34] sm:$0xf]
  %v44 = vld [vmem:[%s1 + $0x38] sm:$0xf]
  %v45 = vld [vmem:[%s1 + $0x3c] sm:$0xf]
  %v46 = vld [vmem:[%s1 + $0x40] sm:$0xf]
  %v47 = vld [vmem:[%s1 + $0x44] sm:$0xf]
  %v48 = vld [vmem:[%s1 + $0x48] sm:$0xf]
  %v49 = vld [vmem:[%s1 + $0x4c] sm:$0xf]
  %v50 = vld [vmem:[%s1 + $0x50] sm:$0xf]
  %v51 = vld [vmem:[%s1 + $0x54] sm:$0xf]
  %v52 = vld [vmem:[%s1 + $0x58] sm:$0xf]
  %v53 = vld [vmem:[%s1 + $0x5c] sm:$0xf]
  %v54 = vld [vmem:[%s1 + $0x60] sm:$0xf]
  %v55 = vld [vmem:[%s1 + $0x64] sm:$0xf]
  %v56 = vld [vmem:[%s1 + $0x68] sm:$0xf]
  %v57 = vld [vmem:[%s1 + $0x6c] sm:$0xf]
  %v58 = vld [vmem:[%s1 + $0x70] sm:$0xf]
  %v59 = vld [vmem:[%s1 + $0x74] sm:$0xf]
  %v60 = vld [vmem:[%s1 + $0x78] sm:$0xf]
  %v61 = vld [vmem:[%s1 + $0x7c] sm:$0xf]
  %v62 = vld [vmem:[%s2] sm:$0x1]
  %v64 = vperm.slane %v62, 0
  %v82 = vunpack.c.l.b16 %v14
  %v83 = vunpack.c.h.b16 %v14
  %v84 = vunpack.c.l.b16 %v15
  %v85 = vunpack.c.h.b16 %v15
  %v86 = vunpack.c.l.b16 %v16
  %v87 = vunpack.c.h.b16 %v16
  %v88 = vunpack.c.l.b16 %v17
  %v89 = vunpack.c.h.b16 %v17
  %v90 = vunpack.c.l.b16 %v18
  %v91 = vunpack.c.h.b16 %v18
  %v92 = vunpack.c.l.b16 %v19
  %v93 = vunpack.c.h.b16 %v19
  %v94 = vunpack.c.l.b16 %v20
  %v95 = vunpack.c.h.b16 %v20
  %v96 = vunpack.c.l.b16 %v21
  %v97 = vunpack.c.h.b16 %v21
  %v98 = vunpack.c.l.b16 %v22
  %v99 = vunpack.c.h.b16 %v22
  %v100 = vunpack.c.l.b16 %v23
  %v101 = vunpack.c.h.b16 %v23
  %v102 = vunpack.c.l.b16 %v24
  %v103 = vunpack.c.h.b16 %v24
  %v104 = vunpack.c.l.b16 %v25
  %v105 = vunpack.c.h.b16 %v25
  %v106 = vunpack.c.l.b16 %v26
  %v107 = vunpack.c.h.b16 %v26
  %v108 = vunpack.c.l.b16 %v27
  %v109 = vunpack.c.h.b16 %v27
  %v110 = vunpack.c.l.b16 %v28
  %v111 = vunpack.c.h.b16 %v28
  %v112 = vunpack.c.l.b16 %v29
  %v113 = vunpack.c.h.b16 %v29
  %v114 = vpack.c.b16 %v84, %v82
  %v115 = vpack.c.b16 %v85, %v83
  %v116 = vpack.c.b16 %v88, %v86
  %v117 = vpack.c.b16 %v89, %v87
  %v118 = vpack.c.b16 %v92, %v90
  %v119 = vpack.c.b16 %v93, %v91
  %v120 = vpack.c.b16 %v96, %v94
  %v121 = vpack.c.b16 %v97, %v95
  %v122 = vpack.c.b16 %v100, %v98
  %v123 = vpack.c.b16 %v101, %v99
  %v124 = vpack.c.b16 %v104, %v102
  %v125 = vpack.c.b16 %v105, %v103
  %v126 = vpack.c.b16 %v108, %v106
  %v127 = vpack.c.b16 %v109, %v107
  %v128 = vpack.c.b16 %v112, %v110
  %v129 = vpack.c.b16 %v113, %v111
  %v178 = vunpack.c.l.b16 %v30
  %v179 = vunpack.c.l.b16 %v31
  %v180 = vunpack.c.l.b16 %v32
  %v181 = vunpack.c.l.b16 %v33
  %v182 = vunpack.c.l.b16 %v34
  %v183 = vunpack.c.l.b16 %v35
  %v184 = vunpack.c.l.b16 %v36
  %v185 = vunpack.c.l.b16 %v37
  %v186 = vunpack.c.l.b16 %v38
  %v187 = vunpack.c.l.b16 %v39
  %v188 = vunpack.c.l.b16 %v40
  %v189 = vunpack.c.l.b16 %v41
  %v190 = vunpack.c.l.b16 %v42
  %v191 = vunpack.c.l.b16 %v43
  %v192 = vunpack.c.l.b16 %v44
  %v193 = vunpack.c.l.b16 %v45
  %v194 = vunpack.c.l.b16 %v46
  %v195 = vunpack.c.l.b16 %v47
  %v196 = vunpack.c.l.b16 %v48
  %v197 = vunpack.c.l.b16 %v49
  %v198 = vunpack.c.l.b16 %v50
  %v199 = vunpack.c.l.b16 %v51
  %v200 = vunpack.c.l.b16 %v52
  %v201 = vunpack.c.l.b16 %v53
  %v202 = vunpack.c.l.b16 %v54
  %v203 = vunpack.c.l.b16 %v55
  %v204 = vunpack.c.l.b16 %v56
  %v205 = vunpack.c.l.b16 %v57
  %v206 = vunpack.c.l.b16 %v58
  %v207 = vunpack.c.l.b16 %v59
  %v208 = vunpack.c.l.b16 %v60
  %v209 = vunpack.c.l.b16 %v61
  %v210 = vpack.c.b16 %v179, %v178
  %v211 = vpack.c.b16 %v181, %v180
  %v212 = vpack.c.b16 %v183, %v182
  %v213 = vpack.c.b16 %v185, %v184
  %v214 = vpack.c.b16 %v187, %v186
  %v215 = vpack.c.b16 %v189, %v188
  %v216 = vpack.c.b16 %v191, %v190
  %v217 = vpack.c.b16 %v193, %v192
  %v218 = vpack.c.b16 %v195, %v194
  %v219 = vpack.c.b16 %v197, %v196
  %v220 = vpack.c.b16 %v199, %v198
  %v221 = vpack.c.b16 %v201, %v200
  %v222 = vpack.c.b16 %v203, %v202
  %v223 = vpack.c.b16 %v205, %v204
  %v224 = vpack.c.b16 %v207, %v206
  %v225 = vpack.c.b16 %v209, %v208
  %242 = vmatpush.bf16.msra.mxu0 %v217
  %243 = vmatpush.bf16.msra.mxu0 %v216
  %244 = vmatpush.bf16.msra.mxu0 %v215
  %245 = vmatpush.bf16.msra.mxu0 %v214
  %246 = vmatpush.bf16.msra.mxu0 %v213
  %247 = vmatpush.bf16.msra.mxu0 %v212
  %248 = vmatpush.bf16.msra.mxu0 %v211
  %249 = vmatpush.bf16.msra.mxu0 %v210
  %250 = vmatmul.bf16.gmra.mxu0 %v114
  %v251 = vpop.f32.mrf.mxu0
  %v252 = vadd.f32 %v64, %v251
  %v253 = vpop.f32.mrf.mxu0
  %v254 = vadd.f32 %v64, %v253
  %255 = vmatmul.bf16.gmra.mxu0 %v116
  %v256 = vpop.f32.mrf.mxu0
  %v257 = vadd.f32 %v64, %v256
  %v258 = vpop.f32.mrf.mxu0
  %v259 = vadd.f32 %v64, %v258
  %260 = vmatmul.bf16.gmra.mxu0 %v118
  %v261 = vpop.f32.mrf.mxu0
  %v262 = vadd.f32 %v64, %v261
  %v263 = vpop.f32.mrf.mxu0
  %v264 = vadd.f32 %v64, %v263
  %265 = vmatmul.bf16.gmra.mxu0 %v120
  %v266 = vpop.f32.mrf.mxu0
  %v267 = vadd.f32 %v64, %v266
  %v268 = vpop.f32.mrf.mxu0
  %v269 = vadd.f32 %v64, %v268
  %270 = vmatmul.bf16.gmra.mxu0 %v122
  %v271 = vpop.f32.mrf.mxu0
  %v272 = vadd.f32 %v64, %v271
  %v273 = vpop.f32.mrf.mxu0
  %v274 = vadd.f32 %v64, %v273
  %275 = vmatmul.bf16.gmra.mxu0 %v124
  %v276 = vpop.f32.mrf.mxu0
  %v277 = vadd.f32 %v64, %v276
  %v278 = vpop.f32.mrf.mxu0
  %v279 = vadd.f32 %v64, %v278
  %280 = vmatmul.bf16.gmra.mxu0 %v126
  %v281 = vpop.f32.mrf.mxu0
  %v282 = vadd.f32 %v64, %v281
  %v283 = vpop.f32.mrf.mxu0
  %v284 = vadd.f32 %v64, %v283
  %285 = vmatmul.bf16.gmra.mxu0 %v128
  %v286 = vpop.f32.mrf.mxu0
  %v287 = vadd.f32 %v64, %v286
  %v288 = vpop.f32.mrf.mxu0
  %v289 = vadd.f32 %v64, %v288
  %290 = vdwg.mxu0
  %291 = vmatpush.bf16.msra.mxu0 %v225
  %292 = vmatpush.bf16.msra.mxu0 %v224
  %293 = vmatpush.bf16.msra.mxu0 %v223
  %294 = vmatpush.bf16.msra.mxu0 %v222
  %295 = vmatpush.bf16.msra.mxu0 %v221
  %296 = vmatpush.bf16.msra.mxu0 %v220
  %297 = vmatpush.bf16.msra.mxu0 %v219
  %298 = vmatpush.bf16.msra.mxu0 %v218
  %299 = vmatmul.bf16.gmra.mxu0 %v115
  %v300 = vpop.f32.mrf.mxu0
  %v301 = vadd.f32 %v252, %v300
  %v302 = vpop.f32.mrf.mxu0
  %v303 = vadd.f32 %v254, %v302
  %304 = vmatmul.bf16.gmra.mxu0 %v117
  %v305 = vpop.f32.mrf.mxu0
  %v306 = vadd.f32 %v257, %v305
  %v307 = vpop.f32.mrf.mxu0
  %v308 = vadd.f32 %v259, %v307
  %309 = vmatmul.bf16.gmra.mxu0 %v119
  %v310 = vpop.f32.mrf.mxu0
  %v311 = vadd.f32 %v262, %v310
  %v312 = vpop.f32.mrf.mxu0
  %v313 = vadd.f32 %v264, %v312
  %314 = vmatmul.bf16.gmra.mxu0 %v121
  %v315 = vpop.f32.mrf.mxu0
  %v316 = vadd.f32 %v267, %v315
  %v317 = vpop.f32.mrf.mxu0
  %v318 = vadd.f32 %v269, %v317
  %319 = vmatmul.bf16.gmra.mxu0 %v123
  %v320 = vpop.f32.mrf.mxu0
  %v321 = vadd.f32 %v272, %v320
  %v322 = vpop.f32.mrf.mxu0
  %v323 = vadd.f32 %v274, %v322
  %324 = vmatmul.bf16.gmra.mxu0 %v125
  %v325 = vpop.f32.mrf.mxu0
  %v326 = vadd.f32 %v277, %v325
  %v327 = vpop.f32.mrf.mxu0
  %v328 = vadd.f32 %v279, %v327
  %329 = vmatmul.bf16.gmra.mxu0 %v127
  %v330 = vpop.f32.mrf.mxu0
  %v331 = vadd.f32 %v282, %v330
  %v332 = vpop.f32.mrf.mxu0
  %v333 = vadd.f32 %v284, %v332
  %334 = vmatmul.bf16.gmra.mxu0 %v129
  %v335 = vpop.f32.mrf.mxu0
  %v336 = vadd.f32 %v287, %v335
  %v337 = vpop.f32.mrf.mxu0
  %v338 = vadd.f32 %v289, %v337
  %339 = vdwg.mxu0
  %v340 = vmax.f32 %v301, 0.0
  %v341 = vmax.f32 %v303, 0.0
  %v342 = vmax.f32 %v306, 0.0
  %v343 = vmax.f32 %v308, 0.0
  %v344 = vmax.f32 %v311, 0.0
  %v345 = vmax.f32 %v313, 0.0
  %v346 = vmax.f32 %v316, 0.0
  %v347 = vmax.f32 %v318, 0.0
  %v348 = vmax.f32 %v321, 0.0
  %v349 = vmax.f32 %v323, 0.0
  %v350 = vmax.f32 %v326, 0.0
  %v351 = vmax.f32 %v328, 0.0
  %v352 = vmax.f32 %v331, 0.0
  %v353 = vmax.f32 %v333, 0.0
  %v354 = vmax.f32 %v336, 0.0
  %v355 = vmax.f32 %v338, 0.0
  %v356 = vpack.c.bf16 %v340, %v340
  %v357 = vpack.c.bf16 %v341, %v341
  %v358 = vpack.c.bf16 %v342, %v342
  %v359 = vpack.c.bf16 %v343, %v343
  %v360 = vpack.c.bf16 %v344, %v344
  %v361 = vpack.c.bf16 %v345, %v345
  %v362 = vpack.c.bf16 %v346, %v346
  %v363 = vpack.c.bf16 %v347, %v347
  %v364 = vpack.c.bf16 %v348, %v348
  %v365 = vpack.c.bf16 %v349, %v349
  %v366 = vpack.c.bf16 %v350, %v350
  %v367 = vpack.c.bf16 %v351, %v351
  %v368 = vpack.c.bf16 %v352, %v352
  %v369 = vpack.c.bf16 %v353, %v353
  %v370 = vpack.c.bf16 %v354, %v354
  %v371 = vpack.c.bf16 %v355, %v355
  %vm372 = vcmask 257024
  %373 = vst.msk [vmem:[%s3] sm:$0xf] %vm372, %v356
  %374 = vst.msk [vmem:[%s3 + $0x4] sm:$0xf] %vm372, %v357
  %375 = vst.msk [vmem:[%s3 + $0x8] sm:$0xf] %vm372, %v358
  %376 = vst.msk [vmem:[%s3 + $0xc] sm:$0xf] %vm372, %v359
  %377 = vst.msk [vmem:[%s3 + $0x10] sm:$0xf] %vm372, %v360
  %378 = vst.msk [vmem:[%s3 + $0x14] sm:$0xf] %vm372, %v361
  %379 = vst.msk [vmem:[%s3 + $0x18] sm:$0xf] %vm372, %v362
  %380 = vst.msk [vmem:[%s3 + $0x1c] sm:$0xf] %vm372, %v363
  %381 = vst.msk [vmem:[%s3 + $0x20] sm:$0xf] %vm372, %v364
  %382 = vst.msk [vmem:[%s3 + $0x24] sm:$0xf] %vm372, %v365
  %383 = vst.msk [vmem:[%s3 + $0x28] sm:$0xf] %vm372, %v366
  %384 = vst.msk [vmem:[%s3 + $0x2c] sm:$0xf] %vm372, %v367
  %385 = vst.msk [vmem:[%s3 + $0x30] sm:$0xf] %vm372, %v368
  %386 = vst.msk [vmem:[%s3 + $0x34] sm:$0xf] %vm372, %v369
  %387 = vst.msk [vmem:[%s3 + $0x38] sm:$0xf] %vm372, %v370
  %388 = vst.msk [vmem:[%s3 + $0x3c] sm:$0xf] %vm372, %v371
  // Predicated region
  $region14: #{citic_forward.5} parent=0 // pred_check
    _
  $region15: #{citic_forward.5} parent=0 // pred_check_branch
    %390 = sbr.rel (0) target = $region17
  $region16: #{citic_forward.5} parent=0 // pred_region
    _
  $region17: #{citic_forward.5} parent=0 // pred_fallthru
    _
  // Predicated region
  $region18: #{citic_forward.5} parent=0 // pred_check
    _
  $region19: #{citic_forward.5} parent=0 // pred_check_branch
    %392 = sbr.rel (0) target = $region21
  $region20: #{citic_forward.5} parent=0 // pred_region
    _
  $region21: #{citic_forward.5} parent=0 // pred_fallthru
    _

// kernel: citic_forward.6
$region0: #{citic_forward.6}
  #allocation0 [shape = 'u32[]', space=smem, size = 0x4, offset = 0x4, fixed_abs, tag = 'smem constant byte address 0x4 - core index']
  #allocation1 [shape = 'u32[72,128]{1,0:T(1,128)}', space=vmem, size = 0x9000, scoped, tag = 'internal scratch']
  %s0 = inlined_call_operand.vmem [shape: bf16[18,512], index: 0, kind: input, shape index: {}]
  %s1 = inlined_call_operand.vmem [shape: bf16[512,64], index: 1, kind: input, shape index: {}]
  %s2 = inlined_call_operand.vmem [shape: f32[1,64], index: 2, kind: input, shape index: {}]
  %s3 = inlined_call_operand.vmem [shape: bf16[18,64], index: 3, kind: output, shape index: {}]
  %s4 = sld [smem:[#allocation0]]
  $region59: #{citic_forward.6} parent=0
    _
  %s6 = ssub.s32 1, %s4
  %s7 = scalar_select 0, %s6, %s4
  $region1: #{citic_forward.6} parent=0
    #allocation2 [shape = 'u8[8192]{0}', space=vmem, size = 0x2000, scoped, tag = 'output window, operand 0, single buffered']
    // Predicated region
    $region2: #{citic_forward.6} parent=1 // pred_check
      _
    $region3: #{citic_forward.6} parent=1 // pred_check_branch
      %9 = sbr.rel (0) target = $region5
    $region4: #{citic_forward.6} parent=1 // pred_region
      _
    $region5: #{citic_forward.6} parent=1 // pred_fallthru
      _
    // Predicated region
    $region6: #{citic_forward.6} parent=1 // pred_check
      _
    $region7: #{citic_forward.6} parent=1 // pred_check_branch
      %11 = sbr.rel (0) target = $region9
    $region8: #{citic_forward.6} parent=1 // pred_region
      _
    $region9: #{citic_forward.6} parent=1 // pred_fallthru
      _
    // Predicated region
    $region10: #{citic_forward.6} parent=1 // pred_check
      _
    $region11: #{citic_forward.6} parent=1 // pred_check_branch
      %13 = sbr.rel (0) target = $region13
    $region12: #{citic_forward.6} parent=1 // pred_region
      _
    $region13: #{citic_forward.6} parent=1 // pred_fallthru
      _
    %v14 = vld [vmem:[%s0] sm:$0xff]
    %v15 = vld [vmem:[%s0 + $0x8] sm:$0xff]
    %v16 = vld [vmem:[%s0 + $0x10] sm:$0xff]
    %v17 = vld [vmem:[%s0 + $0x18] sm:$0xff]
    %v18 = vld [vmem:[%s0 + $0x20] sm:$0xff]
    %v19 = vld [vmem:[%s0 + $0x28] sm:$0xff]
    %v20 = vld [vmem:[%s0 + $0x30] sm:$0xff]
    %v21 = vld [vmem:[%s0 + $0x38] sm:$0xff]
    %v22 = vld [vmem:[%s1] sm:$0xf]
    %v23 = vld [vmem:[%s1 + $0x4] sm:$0xf]
    %v24 = vld [vmem:[%s1 + $0x8] sm:$0xf]
    %v25 = vld [vmem:[%s1 + $0xc] sm:$0xf]
    %v26 = vld [vmem:[%s1 + $0x10] sm:$0xf]
    %v27 = vld [vmem:[%s1 + $0x14] sm:$0xf]
    %v28 = vld [vmem:[%s1 + $0x18] sm:$0xf]
    %v29 = vld [vmem:[%s1 + $0x1c] sm:$0xf]
    %v30 = vld [vmem:[%s1 + $0x20] sm:$0xf]
    %v31 = vld [vmem:[%s1 + $0x24] sm:$0xf]
    %v32 = vld [vmem:[%s1 + $0x28] sm:$0xf]
    %v33 = vld [vmem:[%s1 + $0x2c] sm:$0xf]
    %v34 = vld [vmem:[%s1 + $0x30] sm:$0xf]
    %v35 = vld [vmem:[%s1 + $0x34] sm:$0xf]
    %v36 = vld [vmem:[%s1 + $0x38] sm:$0xf]
    %v37 = vld [vmem:[%s1 + $0x3c] sm:$0xf]
    %v38 = vld [vmem:[%s1 + $0x40] sm:$0xf]
    %v39 = vld [vmem:[%s1 + $0x44] sm:$0xf]
    %v40 = vld [vmem:[%s1 + $0x48] sm:$0xf]
    %v41 = vld [vmem:[%s1 + $0x4c] sm:$0xf]
    %v42 = vld [vmem:[%s1 + $0x50] sm:$0xf]
    %v43 = vld [vmem:[%s1 + $0x54] sm:$0xf]
    %v44 = vld [vmem:[%s1 + $0x58] sm:$0xf]
    %v45 = vld [vmem:[%s1 + $0x5c] sm:$0xf]
    %v46 = vld [vmem:[%s1 + $0x60] sm:$0xf]
    %v47 = vld [vmem:[%s1 + $0x64] sm:$0xf]
    %v48 = vld [vmem:[%s1 + $0x68] sm:$0xf]
    %v49 = vld [vmem:[%s1 + $0x6c] sm:$0xf]
    %v50 = vld [vmem:[%s1 + $0x70] sm:$0xf]
    %v51 = vld [vmem:[%s1 + $0x74] sm:$0xf]
    %v52 = vld [vmem:[%s1 + $0x78] sm:$0xf]
    %v53 = vld [vmem:[%s1 + $0x7c] sm:$0xf]
    %v54 = vld [vmem:[%s1 + $0x80] sm:$0xf]
    %v55 = vld [vmem:[%s1 + $0x84] sm:$0xf]
    %v56 = vld [vmem:[%s1 + $0x88] sm:$0xf]
    %v57 = vld [vmem:[%s1 + $0x8c] sm:$0xf]
    %v58 = vld [vmem:[%s1 + $0x90] sm:$0xf]
    %v59 = vld [vmem:[%s1 + $0x94] sm:$0xf]
    %v60 = vld [vmem:[%s1 + $0x98] sm:$0xf]
    %v61 = vld [vmem:[%s1 + $0x9c] sm:$0xf]
    %v62 = vld [vmem:[%s1 + $0xa0] sm:$0xf]
    %v63 = vld [vmem:[%s1 + $0xa4] sm:$0xf]
    %v64 = vld [vmem:[%s1 + $0xa8] sm:$0xf]
    %v65 = vld [vmem:[%s1 + $0xac] sm:$0xf]
    %v66 = vld [vmem:[%s1 + $0xb0] sm:$0xf]
    %v67 = vld [vmem:[%s1 + $0xb4] sm:$0xf]
    %v68 = vld [vmem:[%s1 + $0xb8] sm:$0xf]
    %v69 = vld [vmem:[%s1 + $0xbc] sm:$0xf]
    %v70 = vld [vmem:[%s1 + $0xc0] sm:$0xf]
    %v71 = vld [vmem:[%s1 + $0xc4] sm:$0xf]
    %v72 = vld [vmem:[%s1 + $0xc8] sm:$0xf]
    %v73 = vld [vmem:[%s1 + $0xcc] sm:$0xf]
    %v74 = vld [vmem:[%s1 + $0xd0] sm:$0xf]
    %v75 = vld [vmem:[%s1 + $0xd4] sm:$0xf]
    %v76 = vld [vmem:[%s1 + $0xd8] sm:$0xf]
    %v77 = vld [vmem:[%s1 + $0xdc] sm:$0xf]
    %v78 = vld [vmem:[%s1 + $0xe0] sm:$0xf]
    %v79 = vld [vmem:[%s1 + $0xe4] sm:$0xf]
    %v80 = vld [vmem:[%s1 + $0xe8] sm:$0xf]
    %v81 = vld [vmem:[%s1 + $0xec] sm:$0xf]
    %v82 = vld [vmem:[%s1 + $0xf0] sm:$0xf]
    %v83 = vld [vmem:[%s1 + $0xf4] sm:$0xf]
    %v84 = vld [vmem:[%s1 + $0xf8] sm:$0xf]
    %v85 = vld [vmem:[%s1 + $0xfc] sm:$0xf]
    %v86 = vld [vmem:[%s2] sm:$0x1]
    %v88 = vperm.slane %v86, 0
    %v98 = vunpack.c.l.b16 %v14
    %v99 = vunpack.c.h.b16 %v14
    %v100 = vunpack.c.l.b16 %v15
    %v101 = vunpack.c.h.b16 %v15
    %v102 = vunpack.c.l.b16 %v16
    %v103 = vunpack.c.h.b16 %v16
    %v104 = vunpack.c.l.b16 %v17
    %v105 = vunpack.c.h.b16 %v17
    %v106 = vunpack.c.l.b16 %v18
    %v107 = vunpack.c.h.b16 %v18
    %v108 = vunpack.c.l.b16 %v19
    %v109 = vunpack.c.h.b16 %v19
    %v110 = vunpack.c.l.b16 %v20
    %v111 = vunpack.c.h.b16 %v20
    %v112 = vunpack.c.l.b16 %v21
    %v113 = vunpack.c.h.b16 %v21
    %v114 = vpack.c.b16 %v102, %v98
    %v115 = vpack.c.b16 %v103, %v99
    %v116 = vpack.c.b16 %v104, %v100
    %v117 = vpack.c.b16 %v105, %v101
    %v118 = vpack.c.b16 %v110, %v106
    %v119 = vpack.c.b16 %v111, %v107
    %v120 = vpack.c.b16 %v112, %v108
    %v121 = vpack.c.b16 %v113, %v109
    %v194 = vunpack.c.l.b16 %v22
    %v195 = vunpack.c.l.b16 %v23
    %v196 = vunpack.c.l.b16 %v24
    %v197 = vunpack.c.l.b16 %v25
    %v198 = vunpack.c.l.b16 %v26
    %v199 = vunpack.c.l.b16 %v27
    %v200 = vunpack.c.l.b16 %v28
    %v201 = vunpack.c.l.b16 %v29
    %v202 = vunpack.c.l.b16 %v30
    %v203 = vunpack.c.l.b16 %v31
    %v204 = vunpack.c.l.b16 %v32
    %v205 = vunpack.c.l.b16 %v33
    %v206 = vunpack.c.l.b16 %v34
    %v207 = vunpack.c.l.b16 %v35
    %v208 = vunpack.c.l.b16 %v36
    %v209 = vunpack.c.l.b16 %v37
    %v210 = vunpack.c.l.b16 %v38
    %v211 = vunpack.c.l.b16 %v39
    %v212 = vunpack.c.l.b16 %v40
    %v213 = vunpack.c.l.b16 %v41
    %v214 = vunpack.c.l.b16 %v42
    %v215 = vunpack.c.l.b16 %v43
    %v216 = vunpack.c.l.b16 %v44
    %v217 = vunpack.c.l.b16 %v45
    %v218 = vunpack.c.l.b16 %v46
    %v219 = vunpack.c.l.b16 %v47
    %v220 = vunpack.c.l.b16 %v48
    %v221 = vunpack.c.l.b16 %v49
    %v222 = vunpack.c.l.b16 %v50
    %v223 = vunpack.c.l.b16 %v51
    %v224 = vunpack.c.l.b16 %v52
    %v225 = vunpack.c.l.b16 %v53
    %v226 = vunpack.c.l.b16 %v54
    %v227 = vunpack.c.l.b16 %v55
    %v228 = vunpack.c.l.b16 %v56
    %v229 = vunpack.c.l.b16 %v57
    %v230 = vunpack.c.l.b16 %v58
    %v231 = vunpack.c.l.b16 %v59
    %v232 = vunpack.c.l.b16 %v60
    %v233 = vunpack.c.l.b16 %v61
    %v234 = vunpack.c.l.b16 %v62
    %v235 = vunpack.c.l.b16 %v63
    %v236 = vunpack.c.l.b16 %v64
    %v237 = vunpack.c.l.b16 %v65
    %v238 = vunpack.c.l.b16 %v66
    %v239 = vunpack.c.l.b16 %v67
    %v240 = vunpack.c.l.b16 %v68
    %v241 = vunpack.c.l.b16 %v69
    %v242 = vunpack.c.l.b16 %v70
    %v243 = vunpack.c.l.b16 %v71
    %v244 = vunpack.c.l.b16 %v72
    %v245 = vunpack.c.l.b16 %v73
    %v246 = vunpack.c.l.b16 %v74
    %v247 = vunpack.c.l.b16 %v75
    %v248 = vunpack.c.l.b16 %v76
    %v249 = vunpack.c.l.b16 %v77
    %v250 = vunpack.c.l.b16 %v78
    %v251 = vunpack.c.l.b16 %v79
    %v252 = vunpack.c.l.b16 %v80
    %v253 = vunpack.c.l.b16 %v81
    %v254 = vunpack.c.l.b16 %v82
    %v255 = vunpack.c.l.b16 %v83
    %v256 = vunpack.c.l.b16 %v84
    %v257 = vunpack.c.l.b16 %v85
    %v258 = vpack.c.b16 %v195, %v194
    %v259 = vpack.c.b16 %v197, %v196
    %v260 = vpack.c.b16 %v199, %v198
    %v261 = vpack.c.b16 %v201, %v200
    %v262 = vpack.c.b16 %v203, %v202
    %v263 = vpack.c.b16 %v205, %v204
    %v264 = vpack.c.b16 %v207, %v206
    %v265 = vpack.c.b16 %v209, %v208
    %v266 = vpack.c.b16 %v211, %v210
    %v267 = vpack.c.b16 %v213, %v212
    %v268 = vpack.c.b16 %v215, %v214
    %v269 = vpack.c.b16 %v217, %v216
    %v270 = vpack.c.b16 %v219, %v218
    %v271 = vpack.c.b16 %v221, %v220
    %v272 = vpack.c.b16 %v223, %v222
    %v273 = vpack.c.b16 %v225, %v224
    %v274 = vpack.c.b16 %v227, %v226
    %v275 = vpack.c.b16 %v229, %v228
    %v276 = vpack.c.b16 %v231, %v230
    %v277 = vpack.c.b16 %v233, %v232
    %v278 = vpack.c.b16 %v235, %v234
    %v279 = vpack.c.b16 %v237, %v236
    %v280 = vpack.c.b16 %v239, %v238
    %v281 = vpack.c.b16 %v241, %v240
    %v282 = vpack.c.b16 %v243, %v242
    %v283 = vpack.c.b16 %v245, %v244
    %v284 = vpack.c.b16 %v247, %v246
    %v285 = vpack.c.b16 %v249, %v248
    %v286 = vpack.c.b16 %v251, %v250
    %v287 = vpack.c.b16 %v253, %v252
    %v288 = vpack.c.b16 %v255, %v254
    %v289 = vpack.c.b16 %v257, %v256
    %322 = vmatpush.bf16.msra.mxu0 %v265
    %323 = vmatpush.bf16.msra.mxu0 %v264
    %324 = vmatpush.bf16.msra.mxu0 %v263
    %325 = vmatpush.bf16.msra.mxu0 %v262
    %326 = vmatpush.bf16.msra.mxu0 %v261
    %327 = vmatpush.bf16.msra.mxu0 %v260
    %328 = vmatpush.bf16.msra.mxu0 %v259
    %329 = vmatpush.bf16.msra.mxu0 %v258
    %330 = vmatmul.bf16.gmra.mxu0 %v114
    %v331 = vpop.f32.mrf.mxu0
    %v332 = vadd.f32 %v88, %v331
    %v333 = vpop.f32.mrf.mxu0
    %v334 = vadd.f32 %v88, %v333
    %335 = vmatmul.bf16.gmra.mxu0 %v118
    %v336 = vpop.f32.mrf.mxu0
    %v337 = vadd.f32 %v88, %v336
    %v338 = vpop.f32.mrf.mxu0
    %v339 = vadd.f32 %v88, %v338
    %340 = vdwg.mxu0
    %341 = vmatpush.bf16.msra.mxu0 %v273
    %342 = vmatpush.bf16.msra.mxu0 %v272
    %343 = vmatpush.bf16.msra.mxu0 %v271
    %344 = vmatpush.bf16.msra.mxu0 %v270
    %345 = vmatpush.bf16.msra.mxu0 %v269
    %346 = vmatpush.bf16.msra.mxu0 %v268
    %347 = vmatpush.bf16.msra.mxu0 %v267
    %348 = vmatpush.bf16.msra.mxu0 %v266
    %349 = vmatmul.bf16.gmra.mxu0 %v115
    %v350 = vpop.f32.mrf.mxu0
    %v351 = vadd.f32 %v332, %v350
    %v352 = vpop.f32.mrf.mxu0
    %v353 = vadd.f32 %v334, %v352
    %354 = vmatmul.bf16.gmra.mxu0 %v119
    %v355 = vpop.f32.mrf.mxu0
    %v356 = vadd.f32 %v337, %v355
    %v357 = vpop.f32.mrf.mxu0
    %v358 = vadd.f32 %v339, %v357
    %359 = vdwg.mxu0
    %360 = vmatpush.bf16.msra.mxu0 %v281
    %361 = vmatpush.bf16.msra.mxu0 %v280
    %362 = vmatpush.bf16.msra.mxu0 %v279
    %363 = vmatpush.bf16.msra.mxu0 %v278
    %364 = vmatpush.bf16.msra.mxu0 %v277
    %365 = vmatpush.bf16.msra.mxu0 %v276
    %366 = vmatpush.bf16.msra.mxu0 %v275
    %367 = vmatpush.bf16.msra.mxu0 %v274
    %368 = vmatmul.bf16.gmra.mxu0 %v116
    %v369 = vpop.f32.mrf.mxu0
    %v370 = vadd.f32 %v351, %v369
    %v371 = vpop.f32.mrf.mxu0
    %v372 = vadd.f32 %v353, %v371
    %373 = vmatmul.bf16.gmra.mxu0 %v120
    %v374 = vpop.f32.mrf.mxu0
    %v375 = vadd.f32 %v356, %v374
    %v376 = vpop.f32.mrf.mxu0
    %v377 = vadd.f32 %v358, %v376
    %378 = vdwg.mxu0
    %379 = vmatpush.bf16.msra.mxu0 %v289
    %380 = vmatpush.bf16.msra.mxu0 %v288
    %381 = vmatpush.bf16.msra.mxu0 %v287
    %382 = vmatpush.bf16.msra.mxu0 %v286
    %383 = vmatpush.bf16.msra.mxu0 %v285
    %384 = vmatpush.bf16.msra.mxu0 %v284
    %385 = vmatpush.bf16.msra.mxu0 %v283
    %386 = vmatpush.bf16.msra.mxu0 %v282
    %387 = vmatmul.bf16.gmra.mxu0 %v117
    %v388 = vpop.f32.mrf.mxu0
    %v389 = vadd.f32 %v370, %v388
    %v390 = vpop.f32.mrf.mxu0
    %v391 = vadd.f32 %v372, %v390
    %392 = vmatmul.bf16.gmra.mxu0 %v121
    %v393 = vpop.f32.mrf.mxu0
    %v394 = vadd.f32 %v375, %v393
    %v395 = vpop.f32.mrf.mxu0
    %v396 = vadd.f32 %v377, %v395
    %397 = vdwg.mxu0
    %v398 = vmax.f32 %v389, 0.0
    %v399 = vmax.f32 %v391, 0.0
    %v400 = vmax.f32 %v394, 0.0
    %v401 = vmax.f32 %v396, 0.0
    %v402 = vpack.c.bf16 %v398, %v398
    %v403 = vpack.c.bf16 %v399, %v399
    %v404 = vpack.c.bf16 %v400, %v400
    %v405 = vpack.c.bf16 %v401, %v401
    %vm406 = vcmask 519168
    %407 = vst.msk [vmem:[#allocation2] sm:$0xf] %vm406, %v402
    %408 = vst.msk [vmem:[#allocation2 + $0x4] sm:$0xf] %vm406, %v403
    %409 = vst.msk [vmem:[#allocation2 + $0x8] sm:$0xf] %vm406, %v404
    %410 = vst.msk [vmem:[#allocation2 + $0xc] sm:$0xf] %vm406, %v405
    // Predicated region
    $region14: #{citic_forward.6} parent=1 // pred_check
      _
    $region15: #{citic_forward.6} parent=1 // pred_check_branch
      %412 = sbr.rel (0) target = $region17
    $region16: #{citic_forward.6} parent=1 // pred_region
      // Predicated region
      $region18: #{citic_forward.6} parent=16 // pred_check
        _
      $region19: #{citic_forward.6} parent=16 // pred_check_branch
        %414 = sbr.rel (0) target = $region21
      $region20: #{citic_forward.6} parent=16 // pred_region
        // Predicated region
        $region22: #{citic_forward.6} parent=20 // pred_check
          _
        $region23: #{citic_forward.6} parent=20 // pred_check_branch
          %416 = sbr.rel target = $region25
        $region24: #{citic_forward.6} parent=20 // pred_region
          // Predicated region
          $region37: #{citic_forward.6} parent=24 // pred_check
            _
          $region38: #{citic_forward.6} parent=24 // pred_check_branch
            %436 = sbr.rel (0) target = $region40
          $region39: #{citic_forward.6} parent=24 // pred_region
            loop: start=0, step=1, limit=1
            $region41: #{citic_forward.6} parent=39 // loop_pre_header
              _
            $region42: #{citic_forward.6} parent=39 // loop_header
              %s438 = sphi 0, %s442
              %p439 = scmp.ge.s32.totalorder %s438, 1
              %s443 = sphi [#allocation2], [#allocation2]
              %s444 = sphi %s3, %s3
            $region43: #{citic_forward.6} parent=39 // loop_header_branch
              %441 = sbr.rel (%p439) target = $region47
            $region44: #{citic_forward.6} parent=39 // loop_body
              _
            $region45: #{citic_forward.6} parent=39 // loop_footer
              %s442 = sadd.s32 1, %s438
            $region46: #{citic_forward.6} parent=39 // loop_footer_branch
              %437 = sbr.rel target = $region42
            $region47: #{citic_forward.6} parent=39 // loop_exit
              _
            %s446 = ssub.s32 16, 1
            loop: start=0, step=1, limit=1
            $region48: #{citic_forward.6} parent=39 // loop_pre_header
              _
            $region49: #{citic_forward.6} parent=39 // loop_header
              %s448 = sphi 0, %s452
              %p449 = scmp.ge.s32.totalorder %s448, 1
              %s453 = sphi [#allocation2], [#allocation2]
              %s454 = sphi %s3, %s3
            $region50: #{citic_forward.6} parent=39 // loop_header_branch
              %451 = sbr.rel (%p449) target = $region54
            $region51: #{citic_forward.6} parent=39 // loop_body
              %v455 = vld [vmem:[%s453] sm:%s446]
              %456 = vst [vmem:[%s454] sm:%s446] %v455
              %v457 = vld [vmem:[%s453 + $0x4] sm:%s446]
              %458 = vst [vmem:[%s454 + $0x4] sm:%s446] %v457
              %v459 = vld [vmem:[%s453 + $0x8] sm:%s446]
              %460 = vst [vmem:[%s454 + $0x8] sm:%s446] %v459
            $region52: #{citic_forward.6} parent=39 // loop_footer
              %s452 = sadd.s32 1, %s448
            $region53: #{citic_forward.6} parent=39 // loop_footer_branch
              %447 = sbr.rel target = $region49
            $region54: #{citic_forward.6} parent=39 // loop_exit
              _
          $region40: #{citic_forward.6} parent=24 // pred_fallthru
            _
        $region25: #{citic_forward.6} parent=20 // pred_fallthru
          _
        // Predicated region
        $region26: #{citic_forward.6} parent=20 // pred_check
          _
        $region27: #{citic_forward.6} parent=20 // pred_check_branch
          %418 = sbr.rel (0) target = $region29
        $region28: #{citic_forward.6} parent=20 // pred_region
          %s420 = ssub.s32 16, 1
          loop: start=0, step=1, limit=1
          $region30: #{citic_forward.6} parent=28 // loop_pre_header
            _
          $region31: #{citic_forward.6} parent=28 // loop_header
            %s422 = sphi 0, %s426
            %p423 = scmp.ge.s32.totalorder %s422, 1
            %s427 = sphi [#allocation2], [#allocation2]
            %s428 = sphi %s3, %s3
          $region32: #{citic_forward.6} parent=28 // loop_header_branch
            %425 = sbr.rel (%p423) target = $region36
          $region33: #{citic_forward.6} parent=28 // loop_body
            %v429 = vld [vmem:[%s427] sm:%s420]
            %430 = vst [vmem:[%s428] sm:%s420] %v429
            %v431 = vld [vmem:[%s427 + $0x4] sm:%s420]
            %432 = vst [vmem:[%s428 + $0x4] sm:%s420] %v431
            %v433 = vld [vmem:[%s427 + $0x8] sm:%s420]
            %434 = vst [vmem:[%s428 + $0x8] sm:%s420] %v433
          $region34: #{citic_forward.6} parent=28 // loop_footer
            %s426 = sadd.s32 1, %s422
          $region35: #{citic_forward.6} parent=28 // loop_footer_branch
            %421 = sbr.rel target = $region31
          $region36: #{citic_forward.6} parent=28 // loop_exit
            _
        $region29: #{citic_forward.6} parent=20 // pred_fallthru
          _
      $region21: #{citic_forward.6} parent=16 // pred_fallthru
        _
      %461 = vnop
    $region17: #{citic_forward.6} parent=1 // pred_fallthru
      _
    // Predicated region
    $region55: #{citic_forward.6} parent=1 // pred_check
      _
    $region56: #{citic_forward.6} parent=1 // pred_check_branch
      %463 = sbr.rel (0) target = $region58
    $region57: #{citic_forward.6} parent=1 // pred_region
      _
    $region58: #{citic_forward.6} parent=1 // pred_fallthru
      _

// kernel: citic_forward.7
$region0: #{citic_forward.7}
  #allocation0 [shape = 'u32[]', space=smem, size = 0x4, offset = 0x4, fixed_abs, tag = 'smem constant byte address 0x4 - core index']
  #allocation1 [shape = 'u32[72,128]{1,0:T(1,128)}', space=vmem, size = 0x9000, scoped, tag = 'internal scratch']
  %s0 = inlined_call_operand.vmem [shape: bf16[2,576], index: 0, kind: input, shape index: {}]
  %s1 = inlined_call_operand.vmem [shape: bf16[576,64], index: 1, kind: input, shape index: {}]
  %s2 = inlined_call_operand.vmem [shape: f32[1,64], index: 2, kind: input, shape index: {}]
  %s3 = inlined_call_operand.vmem [shape: bf16[2,64], index: 3, kind: output, shape index: {}]
  %s4 = sld [smem:[#allocation0]]
  $region52: #{citic_forward.7} parent=0
    _
  %s6 = ssub.s32 1, %s4
  %s7 = scalar_select 0, %s6, %s4
  $region1: #{citic_forward.7} parent=0
    #allocation2 [shape = 'u8[4096]{0}', space=vmem, size = 0x1000, scoped, tag = 'output window, operand 0, single buffered']
    // Predicated region
    $region2: #{citic_forward.7} parent=1 // pred_check
      _
    $region3: #{citic_forward.7} parent=1 // pred_check_branch
      %9 = sbr.rel (0) target = $region5
    $region4: #{citic_forward.7} parent=1 // pred_region
      _
    $region5: #{citic_forward.7} parent=1 // pred_fallthru
      _
    // Predicated region
    $region6: #{citic_forward.7} parent=1 // pred_check
      _
    $region7: #{citic_forward.7} parent=1 // pred_check_branch
      %11 = sbr.rel (0) target = $region9
    $region8: #{citic_forward.7} parent=1 // pred_region
      _
    $region9: #{citic_forward.7} parent=1 // pred_fallthru
      _
    // Predicated region
    $region10: #{citic_forward.7} parent=1 // pred_check
      _
    $region11: #{citic_forward.7} parent=1 // pred_check_branch
      %13 = sbr.rel (0) target = $region13
    $region12: #{citic_forward.7} parent=1 // pred_region
      _
    $region13: #{citic_forward.7} parent=1 // pred_fallthru
      _
    %v15 = vld [vmem:[%s0] sm:$0x1f]
    %v16 = vld [vmem:[%s0 + $0x5] sm:$0x1f]
    %v17 = vld [vmem:[%s0 + $0xa] sm:$0x1f]
    %v18 = vld [vmem:[%s0 + $0xf] sm:$0x1f]
    %v19 = vld [vmem:[%s0 + $0x14] sm:$0x1f]
    %v20 = vld [vmem:[%s0 + $0x19] sm:$0x1f]
    %v21 = vld [vmem:[%s0 + $0x1e] sm:$0x1f]
    %v22 = vld [vmem:[%s0 + $0x23] sm:$0x1f]
    %v23 = vld [vmem:[%s1] sm:$0xf]
    %v24 = vld [vmem:[%s1 + $0x4] sm:$0xf]
    %v25 = vld [vmem:[%s1 + $0x8] sm:$0xf]
    %v26 = vld [vmem:[%s1 + $0xc] sm:$0xf]
    %v27 = vld [vmem:[%s1 + $0x10] sm:$0xf]
    %v28 = vld [vmem:[%s1 + $0x14] sm:$0xf]
    %v29 = vld [vmem:[%s1 + $0x18] sm:$0xf]
    %v30 = vld [vmem:[%s1 + $0x1c] sm:$0xf]
    %v31 = vld [vmem:[%s1 + $0x20] sm:$0xf]
    %v32 = vld [vmem:[%s1 + $0x24] sm:$0xf]
    %v33 = vld [vmem:[%s1 + $0x28] sm:$0xf]
    %v34 = vld [vmem:[%s1 + $0x2c] sm:$0xf]
    %v35 = vld [vmem:[%s1 + $0x30] sm:$0xf]
    %v36 = vld [vmem:[%s1 + $0x34] sm:$0xf]
    %v37 = vld [vmem:[%s1 + $0x38] sm:$0xf]
    %v38 = vld [vmem:[%s1 + $0x3c] sm:$0xf]
    %v39 = vld [vmem:[%s1 + $0x40] sm:$0xf]
    %v40 = vld [vmem:[%s1 + $0x44] sm:$0xf]
    %v41 = vld [vmem:[%s1 + $0x48] sm:$0xf]
    %v42 = vld [vmem:[%s1 + $0x4c] sm:$0xf]
    %v43 = vld [vmem:[%s1 + $0x50] sm:$0xf]
    %v44 = vld [vmem:[%s1 + $0x54] sm:$0xf]
    %v45 = vld [vmem:[%s1 + $0x58] sm:$0xf]
    %v46 = vld [vmem:[%s1 + $0x5c] sm:$0xf]
    %v47 = vld [vmem:[%s1 + $0x60] sm:$0xf]
    %v48 = vld [vmem:[%s1 + $0x64] sm:$0xf]
    %v49 = vld [vmem:[%s1 + $0x68] sm:$0xf]
    %v50 = vld [vmem:[%s1 + $0x6c] sm:$0xf]
    %v51 = vld [vmem:[%s1 + $0x70] sm:$0xf]
    %v52 = vld [vmem:[%s1 + $0x74] sm:$0xf]
    %v53 = vld [vmem:[%s1 + $0x78] sm:$0xf]
    %v54 = vld [vmem:[%s1 + $0x7c] sm:$0xf]
    %v55 = vld [vmem:[%s1 + $0x80] sm:$0xf]
    %v56 = vld [vmem:[%s1 + $0x84] sm:$0xf]
    %v57 = vld [vmem:[%s1 + $0x88] sm:$0xf]
    %v58 = vld [vmem:[%s1 + $0x8c] sm:$0xf]
    %v59 = vld [vmem:[%s1 + $0x90] sm:$0xf]
    %v60 = vld [vmem:[%s1 + $0x94] sm:$0xf]
    %v61 = vld [vmem:[%s1 + $0x98] sm:$0xf]
    %v62 = vld [vmem:[%s1 + $0x9c] sm:$0xf]
    %v63 = vld [vmem:[%s1 + $0xa0] sm:$0xf]
    %v64 = vld [vmem:[%s1 + $0xa4] sm:$0xf]
    %v65 = vld [vmem:[%s1 + $0xa8] sm:$0xf]
    %v66 = vld [vmem:[%s1 + $0xac] sm:$0xf]
    %v67 = vld [vmem:[%s1 + $0xb0] sm:$0xf]
    %v68 = vld [vmem:[%s1 + $0xb4] sm:$0xf]
    %v69 = vld [vmem:[%s1 + $0xb8] sm:$0xf]
    %v70 = vld [vmem:[%s1 + $0xbc] sm:$0xf]
    %v71 = vld [vmem:[%s1 + $0xc0] sm:$0xf]
    %v72 = vld [vmem:[%s1 + $0xc4] sm:$0xf]
    %v73 = vld [vmem:[%s1 + $0xc8] sm:$0xf]
    %v74 = vld [vmem:[%s1 + $0xcc] sm:$0xf]
    %v75 = vld [vmem:[%s1 + $0xd0] sm:$0xf]
    %v76 = vld [vmem:[%s1 + $0xd4] sm:$0xf]
    %v77 = vld [vmem:[%s1 + $0xd8] sm:$0xf]
    %v78 = vld [vmem:[%s1 + $0xdc] sm:$0xf]
    %v79 = vld [vmem:[%s1 + $0xe0] sm:$0xf]
    %v80 = vld [vmem:[%s1 + $0xe4] sm:$0xf]
    %v81 = vld [vmem:[%s1 + $0xe8] sm:$0xf]
    %v82 = vld [vmem:[%s1 + $0xec] sm:$0xf]
    %v83 = vld [vmem:[%s1 + $0xf0] sm:$0xf]
    %v84 = vld [vmem:[%s1 + $0xf4] sm:$0xf]
    %v85 = vld [vmem:[%s1 + $0xf8] sm:$0xf]
    %v86 = vld [vmem:[%s1 + $0xfc] sm:$0xf]
    %v87 = vld [vmem:[%s1 + $0x100] sm:$0xf]
    %v88 = vld [vmem:[%s1 + $0x104] sm:$0xf]
    %v89 = vld [vmem:[%s1 + $0x108] sm:$0xf]
    %v90 = vld [vmem:[%s1 + $0x10c] sm:$0xf]
    %v91 = vld [vmem:[%s1 + $0x110] sm:$0xf]
    %v92 = vld [vmem:[%s1 + $0x114] sm:$0xf]
    %v93 = vld [vmem:[%s1 + $0x118] sm:$0xf]
    %v94 = vld [vmem:[%s1 + $0x11c] sm:$0xf]
    %v95 = vld [vmem:[%s2] sm:$0x1]
    %v97 = vperm.slane %v95, 0
    %100 = vst [vmem:[#allocation1] ss:$9 sm:$0xff] %v15
    %s102 = scalar_lea.vmem [#allocation1], 1
    %103 = vst [vmem:[%s102] ss:$9 sm:$0xff] %v16
    %s105 = scalar_lea.vmem [#allocation1], 2
    %106 = vst [vmem:[%s105] ss:$9 sm:$0xff] %v17
    %s108 = scalar_lea.vmem [#allocation1], 3
    %109 = vst [vmem:[%s108] ss:$9 sm:$0xff] %v18
    %s111 = scalar_lea.vmem [#allocation1], 4
    %112 = vst [vmem:[%s111] ss:$9 sm:$0xff] %v19
    %s114 = scalar_lea.vmem [#allocation1], 5
    %115 = vst [vmem:[%s114] ss:$9 sm:$0xff] %v20
    %s117 = scalar_lea.vmem [#allocation1], 6
    %118 = vst [vmem:[%s117] ss:$9 sm:$0xff] %v21
    %s120 = scalar_lea.vmem [#allocation1], 7
    %121 = vst [vmem:[%s120] ss:$9 sm:$0xff] %v22
    %v122 = vld [vmem:[#allocation1] sm:$0xff]
    %v123 = vld [vmem:[#allocation1 + $0x9] sm:$0xff]
    %v124 = vld [vmem:[#allocation1 + $0x12] sm:$0xff]
    %v125 = vld [vmem:[#allocation1 + $0x1b] sm:$0xff]
    %v126 = vld [vmem:[#allocation1 + $0x24] sm:$0xff]
    %v203 = vunpack.c.l.b16 %v23
    %v204 = vunpack.c.l.b16 %v24
    %v205 = vunpack.c.l.b16 %v25
    %v206 = vunpack.c.l.b16 %v26
    %v207 = vunpack.c.l.b16 %v27
    %v208 = vunpack.c.l.b16 %v28
    %v209 = vunpack.c.l.b16 %v29
    %v210 = vunpack.c.l.b16 %v30
    %v211 = vunpack.c.l.b16 %v31
    %v212 = vunpack.c.l.b16 %v32
    %v213 = vunpack.c.l.b16 %v33
    %v214 = vunpack.c.l.b16 %v34
    %v215 = vunpack.c.l.b16 %v35
    %v216 = vunpack.c.l.b16 %v36
    %v217 = vunpack.c.l.b16 %v37
    %v218 = vunpack.c.l.b16 %v38
    %v219 = vunpack.c.l.b16 %v39
    %v220 = vunpack.c.l.b16 %v40
    %v221 = vunpack.c.l.b16 %v41
    %v222 = vunpack.c.l.b16 %v42
    %v223 = vunpack.c.l.b16 %v43
    %v224 = vunpack.c.l.b16 %v44
    %v225 = vunpack.c.l.b16 %v45
    %v226 = vunpack.c.l.b16 %v46
    %v227 = vunpack.c.l.b16 %v47
    %v228 = vunpack.c.l.b16 %v48
    %v229 = vunpack.c.l.b16 %v49
    %v230 = vunpack.c.l.b16 %v50
    %v231 = vunpack.c.l.b16 %v51
    %v232 = vunpack.c.l.b16 %v52
    %v233 = vunpack.c.l.b16 %v53
    %v234 = vunpack.c.l.b16 %v54
    %v235 = vunpack.c.l.b16 %v55
    %v236 = vunpack.c.l.b16 %v56
    %v237 = vunpack.c.l.b16 %v57
    %v238 = vunpack.c.l.b16 %v58
    %v239 = vunpack.c.l.b16 %v59
    %v240 = vunpack.c.l.b16 %v60
    %v241 = vunpack.c.l.b16 %v61
    %v242 = vunpack.c.l.b16 %v62
    %v243 = vunpack.c.l.b16 %v63
    %v244 = vunpack.c.l.b16 %v64
    %v245 = vunpack.c.l.b16 %v65
    %v246 = vunpack.c.l.b16 %v66
    %v247 = vunpack.c.l.b16 %v67
    %v248 = vunpack.c.l.b16 %v68
    %v249 = vunpack.c.l.b16 %v69
    %v250 = vunpack.c.l.b16 %v70
    %v251 = vunpack.c.l.b16 %v71
    %v252 = vunpack.c.l.b16 %v72
    %v253 = vunpack.c.l.b16 %v73
    %v254 = vunpack.c.l.b16 %v74
    %v255 = vunpack.c.l.b16 %v75
    %v256 = vunpack.c.l.b16 %v76
    %v257 = vunpack.c.l.b16 %v77
    %v258 = vunpack.c.l.b16 %v78
    %v259 = vunpack.c.l.b16 %v79
    %v260 = vunpack.c.l.b16 %v80
    %v261 = vunpack.c.l.b16 %v81
    %v262 = vunpack.c.l.b16 %v82
    %v263 = vunpack.c.l.b16 %v83
    %v264 = vunpack.c.l.b16 %v84
    %v265 = vunpack.c.l.b16 %v85
    %v266 = vunpack.c.l.b16 %v86
    %v267 = vunpack.c.l.b16 %v87
    %v268 = vunpack.c.l.b16 %v88
    %v269 = vunpack.c.l.b16 %v89
    %v270 = vunpack.c.l.b16 %v90
    %v271 = vunpack.c.l.b16 %v91
    %v272 = vunpack.c.l.b16 %v92
    %v273 = vunpack.c.l.b16 %v93
    %v274 = vunpack.c.l.b16 %v94
    %v275 = vpack.c.b16 %v204, %v203
    %v276 = vpack.c.b16 %v206, %v205
    %v277 = vpack.c.b16 %v208, %v207
    %v278 = vpack.c.b16 %v210, %v209
    %v279 = vpack.c.b16 %v212, %v211
    %v280 = vpack.c.b16 %v214, %v213
    %v281 = vpack.c.b16 %v216, %v215
    %v282 = vpack.c.b16 %v218, %v217
    %v283 = vpack.c.b16 %v220, %v219
    %v284 = vpack.c.b16 %v222, %v221
    %v285 = vpack.c.b16 %v224, %v223
    %v286 = vpack.c.b16 %v226, %v225
    %v287 = vpack.c.b16 %v228, %v227
    %v288 = vpack.c.b16 %v230, %v229
    %v289 = vpack.c.b16 %v232, %v231
    %v290 = vpack.c.b16 %v234, %v233
    %v291 = vpack.c.b16 %v236, %v235
    %v292 = vpack.c.b16 %v238, %v237
    %v293 = vpack.c.b16 %v240, %v239
    %v294 = vpack.c.b16 %v242, %v241
    %v295 = vpack.c.b16 %v244, %v243
    %v296 = vpack.c.b16 %v246, %v245
    %v297 = vpack.c.b16 %v248, %v247
    %v298 = vpack.c.b16 %v250, %v249
    %v299 = vpack.c.b16 %v252, %v251
    %v300 = vpack.c.b16 %v254, %v253
    %v301 = vpack.c.b16 %v256, %v255
    %v302 = vpack.c.b16 %v258, %v257
    %v303 = vpack.c.b16 %v260, %v259
    %v304 = vpack.c.b16 %v262, %v261
    %v305 = vpack.c.b16 %v264, %v263
    %v306 = vpack.c.b16 %v266, %v265
    %v307 = vpack.c.b16 %v268, %v267
    %v308 = vpack.c.b16 %v270, %v269
    %v309 = vpack.c.b16 %v272, %v271
    %v310 = vpack.c.b16 %v274, %v273
    %vm347 = vcmask 523264
    %v348 = vsel %vm347, %v126, 0
    %350 = vmatpush.bf16.msra.mxu0 %v282
    %351 = vmatpush.bf16.msra.mxu0 %v281
    %352 = vmatpush.bf16.msra.mxu0 %v280
    %353 = vmatpush.bf16.msra.mxu0 %v279
    %354 = vmatpush.bf16.msra.mxu0 %v278
    %355 = vmatpush.bf16.msra.mxu0 %v277
    %356 = vmatpush.bf16.msra.mxu0 %v276
    %357 = vmatpush.bf16.msra.mxu0 %v275
    %358 = vmatmul.bf16.gmra.mxu0 %v122
    %v359 = vpop.f32.mrf.mxu0
    %v360 = vadd.f32 %v97, %v359
    %v361 = vpop.f32.mrf.mxu0
    %v362 = vadd.f32 %v97, %v361
    %363 = vdwg.mxu0
    %364 = vmatpush.bf16.msra.mxu0 %v290
    %365 = vmatpush.bf16.msra.mxu0 %v289
    %366 = vmatpush.bf16.msra.mxu0 %v288
    %367 = vmatpush.bf16.msra.mxu0 %v287
    %368 = vmatpush.bf16.msra.mxu0 %v286
    %369 = vmatpush.bf16.msra.mxu0 %v285
    %370 = vmatpush.bf16.msra.mxu0 %v284
    %371 = vmatpush.bf16.msra.mxu0 %v283
    %372 = vmatmul.bf16.gmra.mxu0 %v123
    %v373 = vpop.f32.mrf.mxu0
    %v374 = vadd.f32 %v360, %v373
    %v375 = vpop.f32.mrf.mxu0
    %v376 = vadd.f32 %v362, %v375
    %377 = vdwg.mxu0
    %378 = vmatpush.bf16.msra.mxu0 %v298
    %379 = vmatpush.bf16.msra.mxu0 %v297
    %380 = vmatpush.bf16.msra.mxu0 %v296
    %381 = vmatpush.bf16.msra.mxu0 %v295
    %382 = vmatpush.bf16.msra.mxu0 %v294
    %383 = vmatpush.bf16.msra.mxu0 %v293
    %384 = vmatpush.bf16.msra.mxu0 %v292
    %385 = vmatpush.bf16.msra.mxu0 %v291
    %386 = vmatmul.bf16.gmra.mxu0 %v124
    %v387 = vpop.f32.mrf.mxu0
    %v388 = vadd.f32 %v374, %v387
    %v389 = vpop.f32.mrf.mxu0
    %v390 = vadd.f32 %v376, %v389
    %391 = vdwg.mxu0
    %392 = vmatpush.bf16.msra.mxu0 %v306
    %393 = vmatpush.bf16.msra.mxu0 %v305
    %394 = vmatpush.bf16.msra.mxu0 %v304
    %395 = vmatpush.bf16.msra.mxu0 %v303
    %396 = vmatpush.bf16.msra.mxu0 %v302
    %397 = vmatpush.bf16.msra.mxu0 %v301
    %398 = vmatpush.bf16.msra.mxu0 %v300
    %399 = vmatpush.bf16.msra.mxu0 %v299
    %400 = vmatmul.bf16.gmra.mxu0 %v125
    %v401 = vpop.f32.mrf.mxu0
    %v402 = vadd.f32 %v388, %v401
    %v403 = vpop.f32.mrf.mxu0
    %v404 = vadd.f32 %v390, %v403
    %405 = vdwg.mxu0
    %406 = vmatpush.bf16.msra.mxu0 0
    %407 = vmatpush.bf16.msra.mxu0 0
    %408 = vmatpush.bf16.msra.mxu0 0
    %409 = vmatpush.bf16.msra.mxu0 0
    %410 = vmatpush.bf16.msra.mxu0 %v310
    %411 = vmatpush.bf16.msra.mxu0 %v309
    %412 = vmatpush.bf16.msra.mxu0 %v308
    %413 = vmatpush.bf16.msra.mxu0 %v307
    %414 = vmatmul.bf16.gmra.mxu0 %v348
    %v415 = vpop.f32.mrf.mxu0
    %v416 = vadd.f32 %v402, %v415
    %v417 = vpop.f32.mrf.mxu0
    %v418 = vadd.f32 %v404, %v417
    %419 = vdwg.mxu0
    %v420 = vmax.f32 %v416, 0.0
    %v421 = vmax.f32 %v418, 0.0
    %v422 = vpack.c.bf16 %v420, %v420
    %v423 = vpack.c.bf16 %v421, %v421
    %v426 = vrot.slane %v422, 3
    %v427 = vrot.slane %v423, 3
    %vm428 = vcmask 1040384
    %v431 = vsel %vm428, %v422, %v426
    %vm432 = vcmask 1041409
    %v433 = vsel %vm432, %v422, %v426
    %v435 = vrot.slane %v433, 1
    %vm436 = vcmask 1042434
    %v437 = vsel %vm436, %v422, %v426
    %v439 = vrot.slane %v437, 2
    %vm440 = vcmask 1043459
    %v441 = vsel %vm440, %v422, %v426
    %v443 = vrot.slane %v441, 3
    %v446 = vsel %vm428, %v423, %v427
    %v447 = vsel %vm432, %v423, %v427
    %v449 = vrot.slane %v447, 1
    %v450 = vsel %vm436, %v423, %v427
    %v452 = vrot.slane %v450, 2
    %v453 = vsel %vm440, %v423, %v427
    %v455 = vrot.slane %v453, 3
    %vm464 = vcmask 516096
    %465 = vst.msk [vmem:[#allocation2] sm:$0x1] %vm464, %v431
    %466 = vst.msk [vmem:[#allocation2 + $0x1] sm:$0x1] %vm464, %v435
    %467 = vst.msk [vmem:[#allocation2 + $0x2] sm:$0x1] %vm464, %v439
    %468 = vst.msk [vmem:[#allocation2 + $0x3] sm:$0x1] %vm464, %v443
    %469 = vst.msk [vmem:[#allocation2 + $0x4] sm:$0x1] %vm464, %v446
    %470 = vst.msk [vmem:[#allocation2 + $0x5] sm:$0x1] %vm464, %v449
    %471 = vst.msk [vmem:[#allocation2 + $0x6] sm:$0x1] %vm464, %v452
    %472 = vst.msk [vmem:[#allocation2 + $0x7] sm:$0x1] %vm464, %v455
    // Predicated region
    $region14: #{citic_forward.7} parent=1 // pred_check
      _
    $region15: #{citic_forward.7} parent=1 // pred_check_branch
      %474 = sbr.rel (0) target = $region17
    $region16: #{citic_forward.7} parent=1 // pred_region
      // Predicated region
      $region18: #{citic_forward.7} parent=16 // pred_check
        _
      $region19: #{citic_forward.7} parent=16 // pred_check_branch
        %476 = sbr.rel (0) target = $region21
      $region20: #{citic_forward.7} parent=16 // pred_region
        // Predicated region
        $region22: #{citic_forward.7} parent=20 // pred_check
          _
        $region23: #{citic_forward.7} parent=20 // pred_check_branch
          %478 = sbr.rel target = $region25
        $region24: #{citic_forward.7} parent=20 // pred_region
          // Predicated region
          $region37: #{citic_forward.7} parent=24 // pred_check
            _
          $region38: #{citic_forward.7} parent=24 // pred_check_branch
            %494 = sbr.rel (0) target = $region40
          $region39: #{citic_forward.7} parent=24 // pred_region
            %s496 = ssub.s32 2, 1
            loop: start=0, step=1, limit=1
            $region41: #{citic_forward.7} parent=39 // loop_pre_header
              _
            $region42: #{citic_forward.7} parent=39 // loop_header
              %s498 = sphi 0, %s502
              %p499 = scmp.ge.s32.totalorder %s498, 1
              %s503 = sphi [#allocation2], [#allocation2]
              %s504 = sphi %s3, %s3
            $region43: #{citic_forward.7} parent=39 // loop_header_branch
              %501 = sbr.rel (%p499) target = $region47
            $region44: #{citic_forward.7} parent=39 // loop_body
              %v505 = vld [vmem:[%s503] sm:%s496]
              %506 = vst [vmem:[%s504] sm:%s496] %v505
            $region45: #{citic_forward.7} parent=39 // loop_footer
              %s502 = sadd.s32 1, %s498
            $region46: #{citic_forward.7} parent=39 // loop_footer_branch
              %497 = sbr.rel target = $region42
            $region47: #{citic_forward.7} parent=39 // loop_exit
              _
          $region40: #{citic_forward.7} parent=24 // pred_fallthru
            _
        $region25: #{citic_forward.7} parent=20 // pred_fallthru
          _
        // Predicated region
        $region26: #{citic_forward.7} parent=20 // pred_check
          _
        $region27: #{citic_forward.7} parent=20 // pred_check_branch
          %480 = sbr.rel (0) target = $region29
        $region28: #{citic_forward.7} parent=20 // pred_region
          %s482 = ssub.s32 2, 1
          loop: start=0, step=1, limit=1
          $region30: #{citic_forward.7} parent=28 // loop_pre_header
            _
          $region31: #{citic_forward.7} parent=28 // loop_header
            %s484 = sphi 0, %s488
            %p485 = scmp.ge.s32.totalorder %s484, 1
            %s489 = sphi [#allocation2], [#allocation2]
            %s490 = sphi %s3, %s3
          $region32: #{citic_forward.7} parent=28 // loop_header_branch
            %487 = sbr.rel (%p485) target = $region36
          $region33: #{citic_forward.7} parent=28 // loop_body
            %v491 = vld [vmem:[%s489] sm:%s482]
            %492 = vst [vmem:[%s490] sm:%s482] %v491
          $region34: #{citic_forward.7} parent=28 // loop_footer
            %s488 = sadd.s32 1, %s484
          $region35: #{citic_forward.7} parent=28 // loop_footer_branch
            %483 = sbr.rel target = $region31
          $region36: #{citic_forward.7} parent=28 // loop_exit
            _
        $region29: #{citic_forward.7} parent=20 // pred_fallthru
          _
      $region21: #{citic_forward.7} parent=16 // pred_fallthru
        _
      %507 = vnop
    $region17: #{citic_forward.7} parent=1 // pred_fallthru
      _
    // Predicated region
    $region48: #{citic_forward.7} parent=1 // pred_check
      _
    $region49: #{citic_forward.7} parent=1 // pred_check_branch
      %509 = sbr.rel (0) target = $region51
    $region50: #{citic_forward.7} parent=1 // pred_region
      _
    $region51: #{citic_forward.7} parent=1 // pred_fallthru
      _

// kernel: citic_forward.8
$region0: #{citic_forward.8}
  #allocation0 [shape = 'u32[]', space=smem, size = 0x4, offset = 0x4, fixed_abs, tag = 'smem constant byte address 0x4 - core index']
  #allocation1 [shape = 'u32[72,128]{1,0:T(1,128)}', space=vmem, size = 0x9000, scoped, tag = 'internal scratch']
  %s0 = inlined_call_operand.vmem [shape: bf16[2,64], index: 0, kind: input, shape index: {}]
  %s1 = inlined_call_operand.vmem [shape: bf16[64,512], index: 1, kind: input, shape index: {}]
  %s2 = inlined_call_operand.vmem [shape: f32[1,512], index: 2, kind: input, shape index: {}]
  %s3 = inlined_call_operand.vmem [shape: bf16[2,512], index: 3, kind: output, shape index: {}]
  %s4 = sld [smem:[#allocation0]]
  $region52: #{citic_forward.8} parent=0
    _
  %s6 = ssub.s32 1, %s4
  %s7 = scalar_select 0, %s6, %s4
  $region1: #{citic_forward.8} parent=0
    #allocation2 [shape = 'u8[16384]{0}', space=vmem, size = 0x4000, scoped, tag = 'output window, operand 0, single buffered']
    // Predicated region
    $region2: #{citic_forward.8} parent=1 // pred_check
      _
    $region3: #{citic_forward.8} parent=1 // pred_check_branch
      %9 = sbr.rel (0) target = $region5
    $region4: #{citic_forward.8} parent=1 // pred_region
      _
    $region5: #{citic_forward.8} parent=1 // pred_fallthru
      _
    // Predicated region
    $region6: #{citic_forward.8} parent=1 // pred_check
      _
    $region7: #{citic_forward.8} parent=1 // pred_check_branch
      %11 = sbr.rel (0) target = $region9
    $region8: #{citic_forward.8} parent=1 // pred_region
      _
    $region9: #{citic_forward.8} parent=1 // pred_fallthru
      _
    // Predicated region
    $region10: #{citic_forward.8} parent=1 // pred_check
      _
    $region11: #{citic_forward.8} parent=1 // pred_check_branch
      %13 = sbr.rel (0) target = $region13
    $region12: #{citic_forward.8} parent=1 // pred_region
      _
    $region13: #{citic_forward.8} parent=1 // pred_fallthru
      _
    %v15 = vld [vmem:[%s0] sm:$0x1]
    %v16 = vld [vmem:[%s0 + $0x1] sm:$0x1]
    %v17 = vld [vmem:[%s0 + $0x2] sm:$0x1]
    %v18 = vld [vmem:[%s0 + $0x3] sm:$0x1]
    %v19 = vld [vmem:[%s0 + $0x4] sm:$0x1]
    %v20 = vld [vmem:[%s0 + $0x5] sm:$0x1]
    %v21 = vld [vmem:[%s0 + $0x6] sm:$0x1]
    %v22 = vld [vmem:[%s0 + $0x7] sm:$0x1]
    %v23 = vld [vmem:[%s1] sm:$0xff]
    %v24 = vld [vmem:[%s1 + $0x8] sm:$0xff]
    %v25 = vld [vmem:[%s1 + $0x10] sm:$0xff]
    %v26 = vld [vmem:[%s1 + $0x18] sm:$0xff]
    %v27 = vld [vmem:[%s1 + $0x20] sm:$0xff]
    %v28 = vld [vmem:[%s1 + $0x28] sm:$0xff]
    %v29 = vld [vmem:[%s1 + $0x30] sm:$0xff]
    %v30 = vld [vmem:[%s1 + $0x38] sm:$0xff]
    %v31 = vld [vmem:[%s1 + $0x40] sm:$0xff]
    %v32 = vld [vmem:[%s1 + $0x48] sm:$0xff]
    %v33 = vld [vmem:[%s1 + $0x50] sm:$0xff]
    %v34 = vld [vmem:[%s1 + $0x58] sm:$0xff]
    %v35 = vld [vmem:[%s1 + $0x60] sm:$0xff]
    %v36 = vld [vmem:[%s1 + $0x68] sm:$0xff]
    %v37 = vld [vmem:[%s1 + $0x70] sm:$0xff]
    %v38 = vld [vmem:[%s1 + $0x78] sm:$0xff]
    %v39 = vld [vmem:[%s2] sm:$0xf]
    %v41 = vperm.slane %v39, 0
    %v42 = vperm.slane %v39, 1
    %v43 = vperm.slane %v39, 2
    %v44 = vperm.slane %v39, 3
    %50 = vst [vmem:[#allocation1] ss:$9 sm:$0xff] %v15
    %s52 = scalar_lea.vmem [#allocation1], 1
    %53 = vst [vmem:[%s52] ss:$9 sm:$0xff] %v16
    %s55 = scalar_lea.vmem [#allocation1], 2
    %56 = vst [vmem:[%s55] ss:$9 sm:$0xff] %v17
    %s58 = scalar_lea.vmem [#allocation1], 3
    %59 = vst [vmem:[%s58] ss:$9 sm:$0xff] %v18
    %s61 = scalar_lea.vmem [#allocation1], 4
    %62 = vst [vmem:[%s61] ss:$9 sm:$0xff] %v19
    %s64 = scalar_lea.vmem [#allocation1], 5
    %65 = vst [vmem:[%s64] ss:$9 sm:$0xff] %v20
    %s67 = scalar_lea.vmem [#allocation1], 6
    %68 = vst [vmem:[%s67] ss:$9 sm:$0xff] %v21
    %s70 = scalar_lea.vmem [#allocation1], 7
    %71 = vst [vmem:[%s70] ss:$9 sm:$0xff] %v22
    %v72 = vld [vmem:[#allocation1] sm:$0xff]
    %v89 = vunpack.c.l.b16 %v23
    %v90 = vunpack.c.h.b16 %v23
    %v91 = vunpack.c.l.b16 %v24
    %v92 = vunpack.c.h.b16 %v24
    %v93 = vunpack.c.l.b16 %v25
    %v94 = vunpack.c.h.b16 %v25
    %v95 = vunpack.c.l.b16 %v26
    %v96 = vunpack.c.h.b16 %v26
    %v97 = vunpack.c.l.b16 %v27
    %v98 = vunpack.c.h.b16 %v27
    %v99 = vunpack.c.l.b16 %v28
    %v100 = vunpack.c.h.b16 %v28
    %v101 = vunpack.c.l.b16 %v29
    %v102 = vunpack.c.h.b16 %v29
    %v103 = vunpack.c.l.b16 %v30
    %v104 = vunpack.c.h.b16 %v30
    %v105 = vunpack.c.l.b16 %v31
    %v106 = vunpack.c.h.b16 %v31
    %v107 = vunpack.c.l.b16 %v32
    %v108 = vunpack.c.h.b16 %v32
    %v109 = vunpack.c.l.b16 %v33
    %v110 = vunpack.c.h.b16 %v33
    %v111 = vunpack.c.l.b16 %v34
    %v112 = vunpack.c.h.b16 %v34
    %v113 = vunpack.c.l.b16 %v35
    %v114 = vunpack.c.h.b16 %v35
    %v115 = vunpack.c.l.b16 %v36
    %v116 = vunpack.c.h.b16 %v36
    %v117 = vunpack.c.l.b16 %v37
    %v118 = vunpack.c.h.b16 %v37
    %v119 = vunpack.c.l.b16 %v38
    %v120 = vunpack.c.h.b16 %v38
    %v121 = vpack.c.b16 %v93, %v89
    %v122 = vpack.c.b16 %v94, %v90
    %v123 = vpack.c.b16 %v95, %v91
    %v124 = vpack.c.b16 %v96, %v92
    %v125 = vpack.c.b16 %v101, %v97
    %v126 = vpack.c.b16 %v102, %v98
    %v127 = vpack.c.b16 %v103, %v99
    %v128 = vpack.c.b16 %v104, %v100
    %v129 = vpack.c.b16 %v109, %v105
    %v130 = vpack.c.b16 %v110, %v106
    %v131 = vpack.c.b16 %v111, %v107
    %v132 = vpack.c.b16 %v112, %v108
    %v133 = vpack.c.b16 %v117, %v113
    %v134 = vpack.c.b16 %v118, %v114
    %v135 = vpack.c.b16 %v119, %v115
    %v136 = vpack.c.b16 %v120, %v116
    %vm153 = vcmask 523264
    %v154 = vsel %vm153, %v72, 0
    %156 = vmatpush.bf16.msra.mxu0 0
    %157 = vmatpush.bf16.msra.mxu0 0
    %158 = vmatpush.bf16.msra.mxu0 0
    %159 = vmatpush.bf16.msra.mxu0 0
    %160 = vmatpush.bf16.msra.mxu0 %v133
    %161 = vmatpush.bf16.msra.mxu0 %v129
    %162 = vmatpush.bf16.msra.mxu0 %v125
    %163 = vmatpush.bf16.msra.mxu0 %v121
    %164 = vmatmul.bf16.gmra.mxu0 %v154
    %v165 = vpop.f32.mrf.mxu0
    %v166 = vadd.f32 %v41, %v165
    %v167 = vpop.f32.mrf.mxu0
    %v168 = vadd.f32 %v41, %v167
    %169 = vdwg.mxu0
    %170 = vmatpush.bf16.msra.mxu0 0
    %171 = vmatpush.bf16.msra.mxu0 0
    %172 = vmatpush.bf16.msra.mxu0 0
    %173 = vmatpush.bf16.msra.mxu0 0
    %174 = vmatpush.bf16.msra.mxu0 %v134
    %175 = vmatpush.bf16.msra.mxu0 %v130
    %176 = vmatpush.bf16.msra.mxu0 %v126
    %177 = vmatpush.bf16.msra.mxu0 %v122
    %178 = vmatmul.bf16.gmra.mxu0 %v154
    %v179 = vpop.f32.mrf.mxu0
    %v180 = vadd.f32 %v42, %v179
    %v181 = vpop.f32.mrf.mxu0
    %v182 = vadd.f32 %v42, %v181
    %183 = vdwg.mxu0
    %184 = vmatpush.bf16.msra.mxu0 0
    %185 = vmatpush.bf16.msra.mxu0 0
    %186 = vmatpush.bf16.msra.mxu0 0
    %187 = vmatpush.bf16.msra.mxu0 0
    %188 = vmatpush.bf16.msra.mxu0 %v135
    %189 = vmatpush.bf16.msra.mxu0 %v131
    %190 = vmatpush.bf16.msra.mxu0 %v127
    %191 = vmatpush.bf16.msra.mxu0 %v123
    %192 = vmatmul.bf16.gmra.mxu0 %v154
    %v193 = vpop.f32.mrf.mxu0
    %v194 = vadd.f32 %v43, %v193
    %v195 = vpop.f32.mrf.mxu0
    %v196 = vadd.f32 %v43, %v195
    %197 = vdwg.mxu0
    %198 = vmatpush.bf16.msra.mxu0 0
    %199 = vmatpush.bf16.msra.mxu0 0
    %200 = vmatpush.bf16.msra.mxu0 0
    %201 = vmatpush.bf16.msra.mxu0 0
    %202 = vmatpush.bf16.msra.mxu0 %v136
    %203 = vmatpush.bf16.msra.mxu0 %v132
    %204 = vmatpush.bf16.msra.mxu0 %v128
    %205 = vmatpush.bf16.msra.mxu0 %v124
    %206 = vmatmul.bf16.gmra.mxu0 %v154
    %v207 = vpop.f32.mrf.mxu0
    %v208 = vadd.f32 %v44, %v207
    %v209 = vpop.f32.mrf.mxu0
    %v210 = vadd.f32 %v44, %v209
    %211 = vdwg.mxu0
    %v212 = vmax.f32 %v166, 0.0
    %v213 = vmax.f32 %v180, 0.0
    %v214 = vmax.f32 %v194, 0.0
    %v215 = vmax.f32 %v208, 0.0
    %v216 = vmax.f32 %v168, 0.0
    %v217 = vmax.f32 %v182, 0.0
    %v218 = vmax.f32 %v196, 0.0
    %v219 = vmax.f32 %v210, 0.0
    %v220 = vpack.c.bf16 %v213, %v212
    %v221 = vpack.c.bf16 %v215, %v214
    %v222 = vpack.c.bf16 %v217, %v216
    %v223 = vpack.c.bf16 %v219, %v218
    %v228 = vrot.slane %v220, 3
    %v229 = vrot.slane %v221, 6
    %v230 = vrot.slane %v221, 1
    %v231 = vrot.slane %v222, 3
    %v232 = vrot.slane %v223, 6
    %v233 = vrot.slane %v223, 1
    %vm234 = vcmask 1040384
    %v237 = vsel %vm234, %v220, %v228
    %vm238 = vcmask 1042434
    %v241 = vsel %vm238, %v229, %v230
    %vm242 = vcmask 1041408
    %v243 = vsel %vm242, %v237, %v241
    %vm244 = vcmask 1041409
    %v245 = vsel %vm244, %v220, %v228
    %vm246 = vcmask 1043459
    %v247 = vsel %vm246, %v229, %v230
    %vm248 = vcmask 1042433
    %v249 = vsel %vm248, %v245, %v247
    %v251 = vrot.slane %v249, 1
    %v252 = vsel %vm238, %v220, %v228
    %vm253 = vcmask 1044484
    %v254 = vsel %vm253, %v229, %v230
    %vm255 = vcmask 1043458
    %v256 = vsel %vm255, %v252, %v254
    %v258 = vrot.slane %v256, 2
    %v259 = vsel %vm246, %v220, %v228
    %vm260 = vcmask 1045509
    %v261 = vsel %vm260, %v229, %v230
    %vm262 = vcmask 1044483
    %v263 = vsel %vm262, %v259, %v261
    %v265 = vrot.slane %v263, 3
    %v268 = vsel %vm234, %v222, %v231
    %v271 = vsel %vm238, %v232, %v233
    %v272 = vsel %vm242, %v268, %v271
    %v273 = vsel %vm244, %v222, %v231
    %v274 = vsel %vm246, %v232, %v233
    %v275 = vsel %vm248, %v273, %v274
    %v277 = vrot.slane %v275, 1
    %v278 = vsel %vm238, %v222, %v231
    %v279 = vsel %vm253, %v232, %v233
    %v280 = vsel %vm255, %v278, %v279
    %v282 = vrot.slane %v280, 2
    %v283 = vsel %vm246, %v222, %v231
    %v284 = vsel %vm260, %v232, %v233
    %v285 = vsel %vm262, %v283, %v284
    %v287 = vrot.slane %v285, 3
    %296 = vst [vmem:[#allocation2] sm:$0xf] %v243
    %297 = vst [vmem:[#allocation2 + $0x4] sm:$0xf] %v251
    %298 = vst [vmem:[#allocation2 + $0x8] sm:$0xf] %v258
    %299 = vst [vmem:[#allocation2 + $0xc] sm:$0xf] %v265
    %300 = vst [vmem:[#allocation2 + $0x10] sm:$0xf] %v272
    %301 = vst [vmem:[#allocation2 + $0x14] sm:$0xf] %v277
    %302 = vst [vmem:[#allocation2 + $0x18] sm:$0xf] %v282
    %303 = vst [vmem:[#allocation2 + $0x1c] sm:$0xf] %v287
    // Predicated region
    $region14: #{citic_forward.8} parent=1 // pred_check
      _
    $region15: #{citic_forward.8} parent=1 // pred_check_branch
      %305 = sbr.rel (0) target = $region17
    $region16: #{citic_forward.8} parent=1 // pred_region
      // Predicated region
      $region18: #{citic_forward.8} parent=16 // pred_check
        _
      $region19: #{citic_forward.8} parent=16 // pred_check_branch
        %307 = sbr.rel (0) target = $region21
      $region20: #{citic_forward.8} parent=16 // pred_region
        // Predicated region
        $region22: #{citic_forward.8} parent=20 // pred_check
          _
        $region23: #{citic_forward.8} parent=20 // pred_check_branch
          %309 = sbr.rel target = $region25
        $region24: #{citic_forward.8} parent=20 // pred_region
          // Predicated region
          $region37: #{citic_forward.8} parent=24 // pred_check
            _
          $region38: #{citic_forward.8} parent=24 // pred_check_branch
            %325 = sbr.rel (0) target = $region40
          $region39: #{citic_forward.8} parent=24 // pred_region
            %s327 = ssub.s32 16, 1
            loop: start=0, step=1, limit=1
            $region41: #{citic_forward.8} parent=39 // loop_pre_header
              _
            $region42: #{citic_forward.8} parent=39 // loop_header
              %s329 = sphi 0, %s333
              %p330 = scmp.ge.s32.totalorder %s329, 1
              %s334 = sphi [#allocation2], [#allocation2]
              %s335 = sphi %s3, %s3
            $region43: #{citic_forward.8} parent=39 // loop_header_branch
              %332 = sbr.rel (%p330) target = $region47
            $region44: #{citic_forward.8} parent=39 // loop_body
              %v336 = vld [vmem:[%s334] sm:%s327]
              %337 = vst [vmem:[%s335] sm:%s327] %v336
            $region45: #{citic_forward.8} parent=39 // loop_footer
              %s333 = sadd.s32 1, %s329
            $region46: #{citic_forward.8} parent=39 // loop_footer_branch
              %328 = sbr.rel target = $region42
            $region47: #{citic_forward.8} parent=39 // loop_exit
              _
          $region40: #{citic_forward.8} parent=24 // pred_fallthru
            _
        $region25: #{citic_forward.8} parent=20 // pred_fallthru
          _
        // Predicated region
        $region26: #{citic_forward.8} parent=20 // pred_check
          _
        $region27: #{citic_forward.8} parent=20 // pred_check_branch
          %311 = sbr.rel (0) target = $region29
        $region28: #{citic_forward.8} parent=20 // pred_region
          %s313 = ssub.s32 16, 1
          loop: start=0, step=1, limit=1
          $region30: #{citic_forward.8} parent=28 // loop_pre_header
            _
          $region31: #{citic_forward.8} parent=28 // loop_header
            %s315 = sphi 0, %s319
            %p316 = scmp.ge.s32.totalorder %s315, 1
            %s320 = sphi [#allocation2], [#allocation2]
            %s321 = sphi %s3, %s3
          $region32: #{citic_forward.8} parent=28 // loop_header_branch
            %318 = sbr.rel (%p316) target = $region36
          $region33: #{citic_forward.8} parent=28 // loop_body
            %v322 = vld [vmem:[%s320] sm:%s313]
            %323 = vst [vmem:[%s321] sm:%s313] %v322
          $region34: #{citic_forward.8} parent=28 // loop_footer
            %s319 = sadd.s32 1, %s315
          $region35: #{citic_forward.8} parent=28 // loop_footer_branch
            %314 = sbr.rel target = $region31
          $region36: #{citic_forward.8} parent=28 // loop_exit
            _
        $region29: #{citic_forward.8} parent=20 // pred_fallthru
          _
      $region21: #{citic_forward.8} parent=16 // pred_fallthru
        _
      %338 = vnop
    $region17: #{citic_forward.8} parent=1 // pred_fallthru
      _
    // Predicated region
    $region48: #{citic_forward.8} parent=1 // pred_check
      _
    $region49: #{citic_forward.8} parent=1 // pred_check_branch
      %340 = sbr.rel (0) target = $region51
    $region50: #{citic_forward.8} parent=1 // pred_region
      _
    $region51: #{citic_forward.8} parent=1 // pred_fallthru
      _

// kernel: citic_forward.9
$region0: #{citic_forward.9}
  #allocation0 [shape = 'u32[]', space=smem, size = 0x4, offset = 0x4, fixed_abs, tag = 'smem constant byte address 0x4 - core index']
  #allocation1 [shape = 'u32[72,128]{1,0:T(1,128)}', space=vmem, size = 0x9000, scoped, tag = 'internal scratch']
  %s0 = inlined_call_operand.vmem [shape: bf16[2,512], index: 0, kind: input, shape index: {}]
  %s1 = inlined_call_operand.vmem [shape: bf16[512,6], index: 1, kind: input, shape index: {}]
  %s2 = inlined_call_operand.vmem [shape: f32[1,6], index: 2, kind: input, shape index: {}]
  %s3 = inlined_call_operand.hbm [shape: f32[2,6], index: 3, kind: output, shape index: {}]
  %s4 = sld [smem:[#allocation0]]
  $region22: #{citic_forward.9} parent=0
    _
  %s6 = ssub.s32 1, %s4
  %s7 = scalar_select 0, %s6, %s4
  $region1: #{citic_forward.9} parent=0
    #allocation2 [shape = 'u8[8192]{0}', space=vmem, size = 0x2000, scoped, tag = 'output window, operand 0, single buffered']
    #allocation3 [shape = 's32[1]{0}', space=sflag, size = 0x4, scoped, tag = 'scoped memory for citic_forward.9']
    %8 = vsyncpa [#allocation3], 0
    // Predicated region
    $region2: #{citic_forward.9} parent=1 // pred_check
      _
    $region3: #{citic_forward.9} parent=1 // pred_check_branch
      %10 = sbr.rel (0) target = $region5
    $region4: #{citic_forward.9} parent=1 // pred_region
      _
    $region5: #{citic_forward.9} parent=1 // pred_fallthru
      _
    // Predicated region
    $region6: #{citic_forward.9} parent=1 // pred_check
      _
    $region7: #{citic_forward.9} parent=1 // pred_check_branch
      %12 = sbr.rel (0) target = $region9
    $region8: #{citic_forward.9} parent=1 // pred_region
      _
    $region9: #{citic_forward.9} parent=1 // pred_fallthru
      _
    // Predicated region
    $region10: #{citic_forward.9} parent=1 // pred_check
      _
    $region11: #{citic_forward.9} parent=1 // pred_check_branch
      %14 = sbr.rel (0) target = $region13
    $region12: #{citic_forward.9} parent=1 // pred_region
      _
    $region13: #{citic_forward.9} parent=1 // pred_fallthru
      _
    %v15 = vld [vmem:[%s0] sm:$0xf]
    %v16 = vld [vmem:[%s0 + $0x4] sm:$0xf]
    %v17 = vld [vmem:[%s0 + $0x8] sm:$0xf]
    %v18 = vld [vmem:[%s0 + $0xc] sm:$0xf]
    %v19 = vld [vmem:[%s0 + $0x10] sm:$0xf]
    %v20 = vld [vmem:[%s0 + $0x14] sm:$0xf]
    %v21 = vld [vmem:[%s0 + $0x18] sm:$0xf]
    %v22 = vld [vmem:[%s0 + $0x1c] sm:$0xf]
    %v23 = vld [vmem:[%s1] sm:$0xf]
    %v24 = vld [vmem:[%s1 + $0x4] sm:$0xf]
    %v25 = vld [vmem:[%s1 + $0x8] sm:$0xf]
    %v26 = vld [vmem:[%s1 + $0xc] sm:$0xf]
    %v27 = vld [vmem:[%s1 + $0x10] sm:$0xf]
    %v28 = vld [vmem:[%s1 + $0x14] sm:$0xf]
    %v29 = vld [vmem:[%s1 + $0x18] sm:$0xf]
    %v30 = vld [vmem:[%s1 + $0x1c] sm:$0xf]
    %v31 = vld [vmem:[%s1 + $0x20] sm:$0xf]
    %v32 = vld [vmem:[%s1 + $0x24] sm:$0xf]
    %v33 = vld [vmem:[%s1 + $0x28] sm:$0xf]
    %v34 = vld [vmem:[%s1 + $0x2c] sm:$0xf]
    %v35 = vld [vmem:[%s1 + $0x30] sm:$0xf]
    %v36 = vld [vmem:[%s1 + $0x34] sm:$0xf]
    %v37 = vld [vmem:[%s1 + $0x38] sm:$0xf]
    %v38 = vld [vmem:[%s1 + $0x3c] sm:$0xf]
    %v39 = vld [vmem:[%s1 + $0x40] sm:$0xf]
    %v40 = vld [vmem:[%s1 + $0x44] sm:$0xf]
    %v41 = vld [vmem:[%s1 + $0x48] sm:$0xf]
    %v42 = vld [vmem:[%s1 + $0x4c] sm:$0xf]
    %v43 = vld [vmem:[%s1 + $0x50] sm:$0xf]
    %v44 = vld [vmem:[%s1 + $0x54] sm:$0xf]
    %v45 = vld [vmem:[%s1 + $0x58] sm:$0xf]
    %v46 = vld [vmem:[%s1 + $0x5c] sm:$0xf]
    %v47 = vld [vmem:[%s1 + $0x60] sm:$0xf]
    %v48 = vld [vmem:[%s1 + $0x64] sm:$0xf]
    %v49 = vld [vmem:[%s1 + $0x68] sm:$0xf]
    %v50 = vld [vmem:[%s1 + $0x6c] sm:$0xf]
    %v51 = vld [vmem:[%s1 + $0x70] sm:$0xf]
    %v52 = vld [vmem:[%s1 + $0x74] sm:$0xf]
    %v53 = vld [vmem:[%s1 + $0x78] sm:$0xf]
    %v54 = vld [vmem:[%s1 + $0x7c] sm:$0xf]
    %v55 = vld [vmem:[%s1 + $0x80] sm:$0xf]
    %v56 = vld [vmem:[%s1 + $0x84] sm:$0xf]
    %v57 = vld [vmem:[%s1 + $0x88] sm:$0xf]
    %v58 = vld [vmem:[%s1 + $0x8c] sm:$0xf]
    %v59 = vld [vmem:[%s1 + $0x90] sm:$0xf]
    %v60 = vld [vmem:[%s1 + $0x94] sm:$0xf]
    %v61 = vld [vmem:[%s1 + $0x98] sm:$0xf]
    %v62 = vld [vmem:[%s1 + $0x9c] sm:$0xf]
    %v63 = vld [vmem:[%s1 + $0xa0] sm:$0xf]
    %v64 = vld [vmem:[%s1 + $0xa4] sm:$0xf]
    %v65 = vld [vmem:[%s1 + $0xa8] sm:$0xf]
    %v66 = vld [vmem:[%s1 + $0xac] sm:$0xf]
    %v67 = vld [vmem:[%s1 + $0xb0] sm:$0xf]
    %v68 = vld [vmem:[%s1 + $0xb4] sm:$0xf]
    %v69 = vld [vmem:[%s1 + $0xb8] sm:$0xf]
    %v70 = vld [vmem:[%s1 + $0xbc] sm:$0xf]
    %v71 = vld [vmem:[%s1 + $0xc0] sm:$0xf]
    %v72 = vld [vmem:[%s1 + $0xc4] sm:$0xf]
    %v73 = vld [vmem:[%s1 + $0xc8] sm:$0xf]
    %v74 = vld [vmem:[%s1 + $0xcc] sm:$0xf]
    %v75 = vld [vmem:[%s1 + $0xd0] sm:$0xf]
    %v76 = vld [vmem:[%s1 + $0xd4] sm:$0xf]
    %v77 = vld [vmem:[%s1 + $0xd8] sm:$0xf]
    %v78 = vld [vmem:[%s1 + $0xdc] sm:$0xf]
    %v79 = vld [vmem:[%s1 + $0xe0] sm:$0xf]
    %v80 = vld [vmem:[%s1 + $0xe4] sm:$0xf]
    %v81 = vld [vmem:[%s1 + $0xe8] sm:$0xf]
    %v82 = vld [vmem:[%s1 + $0xec] sm:$0xf]
    %v83 = vld [vmem:[%s1 + $0xf0] sm:$0xf]
    %v84 = vld [vmem:[%s1 + $0xf4] sm:$0xf]
    %v85 = vld [vmem:[%s1 + $0xf8] sm:$0xf]
    %v86 = vld [vmem:[%s1 + $0xfc] sm:$0xf]
    %v87 = vld [vmem:[%s2] sm:$0x1]
    %v89 = vperm.slane %v87, 0
    %92 = vst [vmem:[#allocation1] ss:$9 sm:$0xff] %v15
    %s94 = scalar_lea.vmem [#allocation1], 1
    %95 = vst [vmem:[%s94] ss:$9 sm:$0xff] %v16
    %s97 = scalar_lea.vmem [#allocation1], 2
    %98 = vst [vmem:[%s97] ss:$9 sm:$0xff] %v17
    %s100 = scalar_lea.vmem [#allocation1], 3
    %101 = vst [vmem:[%s100] ss:$9 sm:$0xff] %v18
    %s103 = scalar_lea.vmem [#allocation1], 4
    %104 = vst [vmem:[%s103] ss:$9 sm:$0xff] %v19
    %s106 = scalar_lea.vmem [#allocation1], 5
    %107 = vst [vmem:[%s106] ss:$9 sm:$0xff] %v20
    %s109 = scalar_lea.vmem [#allocation1], 6
    %110 = vst [vmem:[%s109] ss:$9 sm:$0xff] %v21
    %s112 = scalar_lea.vmem [#allocation1], 7
    %113 = vst [vmem:[%s112] ss:$9 sm:$0xff] %v22
    %v114 = vld [vmem:[#allocation1] sm:$0xff]
    %v115 = vld [vmem:[#allocation1 + $0x9] sm:$0xff]
    %v116 = vld [vmem:[#allocation1 + $0x12] sm:$0xff]
    %v117 = vld [vmem:[#allocation1 + $0x1b] sm:$0xff]
    %v186 = vunpack.c.l.b16 %v23
    %v187 = vunpack.c.l.b16 %v24
    %v188 = vunpack.c.l.b16 %v25
    %v189 = vunpack.c.l.b16 %v26
    %v190 = vunpack.c.l.b16 %v27
    %v191 = vunpack.c.l.b16 %v28
    %v192 = vunpack.c.l.b16 %v29
    %v193 = vunpack.c.l.b16 %v30
    %v194 = vunpack.c.l.b16 %v31
    %v195 = vunpack.c.l.b16 %v32
    %v196 = vunpack.c.l.b16 %v33
    %v197 = vunpack.c.l.b16 %v34
    %v198 = vunpack.c.l.b16 %v35
    %v199 = vunpack.c.l.b16 %v36
    %v200 = vunpack.c.l.b16 %v37
    %v201 = vunpack.c.l.b16 %v38
    %v202 = vunpack.c.l.b16 %v39
    %v203 = vunpack.c.l.b16 %v40
    %v204 = vunpack.c.l.b16 %v41
    %v205 = vunpack.c.l.b16 %v42
    %v206 = vunpack.c.l.b16 %v43
    %v207 = vunpack.c.l.b16 %v44
    %v208 = vunpack.c.l.b16 %v45
    %v209 = vunpack.c.l.b16 %v46
    %v210 = vunpack.c.l.b16 %v47
    %v211 = vunpack.c.l.b16 %v48
    %v212 = vunpack.c.l.b16 %v49
    %v213 = vunpack.c.l.b16 %v50
    %v214 = vunpack.c.l.b16 %v51
    %v215 = vunpack.c.l.b16 %v52
    %v216 = vunpack.c.l.b16 %v53
    %v217 = vunpack.c.l.b16 %v54
    %v218 = vunpack.c.l.b16 %v55
    %v219 = vunpack.c.l.b16 %v56
    %v220 = vunpack.c.l.b16 %v57
    %v221 = vunpack.c.l.b16 %v58
    %v222 = vunpack.c.l.b16 %v59
    %v223 = vunpack.c.l.b16 %v60
    %v224 = vunpack.c.l.b16 %v61
    %v225 = vunpack.c.l.b16 %v62
    %v226 = vunpack.c.l.b16 %v63
    %v227 = vunpack.c.l.b16 %v64
    %v228 = vunpack.c.l.b16 %v65
    %v229 = vunpack.c.l.b16 %v66
    %v230 = vunpack.c.l.b16 %v67
    %v231 = vunpack.c.l.b16 %v68
    %v232 = vunpack.c.l.b16 %v69
    %v233 = vunpack.c.l.b16 %v70
    %v234 = vunpack.c.l.b16 %v71
    %v235 = vunpack.c.l.b16 %v72
    %v236 = vunpack.c.l.b16 %v73
    %v237 = vunpack.c.l.b16 %v74
    %v238 = vunpack.c.l.b16 %v75
    %v239 = vunpack.c.l.b16 %v76
    %v240 = vunpack.c.l.b16 %v77
    %v241 = vunpack.c.l.b16 %v78
    %v242 = vunpack.c.l.b16 %v79
    %v243 = vunpack.c.l.b16 %v80
    %v244 = vunpack.c.l.b16 %v81
    %v245 = vunpack.c.l.b16 %v82
    %v246 = vunpack.c.l.b16 %v83
    %v247 = vunpack.c.l.b16 %v84
    %v248 = vunpack.c.l.b16 %v85
    %v249 = vunpack.c.l.b16 %v86
    %v250 = vpack.c.b16 %v187, %v186
    %v251 = vpack.c.b16 %v189, %v188
    %v252 = vpack.c.b16 %v191, %v190
    %v253 = vpack.c.b16 %v193, %v192
    %v254 = vpack.c.b16 %v195, %v194
    %v255 = vpack.c.b16 %v197, %v196
    %v256 = vpack.c.b16 %v199, %v198
    %v257 = vpack.c.b16 %v201, %v200
    %v258 = vpack.c.b16 %v203, %v202
    %v259 = vpack.c.b16 %v205, %v204
    %v260 = vpack.c.b16 %v207, %v206
    %v261 = vpack.c.b16 %v209, %v208
    %v262 = vpack.c.b16 %v211, %v210
    %v263 = vpack.c.b16 %v213, %v212
    %v264 = vpack.c.b16 %v215, %v214
    %v265 = vpack.c.b16 %v217, %v216
    %v266 = vpack.c.b16 %v219, %v218
    %v267 = vpack.c.b16 %v221, %v220
    %v268 = vpack.c.b16 %v223, %v222
    %v269 = vpack.c.b16 %v225, %v224
    %v270 = vpack.c.b16 %v227, %v226
    %v271 = vpack.c.b16 %v229, %v228
    %v272 = vpack.c.b16 %v231, %v230
    %v273 = vpack.c.b16 %v233, %v232
    %v274 = vpack.c.b16 %v235, %v234
    %v275 = vpack.c.b16 %v237, %v236
    %v276 = vpack.c.b16 %v239, %v238
    %v277 = vpack.c.b16 %v241, %v240
    %v278 = vpack.c.b16 %v243, %v242
    %v279 = vpack.c.b16 %v245, %v244
    %v280 = vpack.c.b16 %v247, %v246
    %v281 = vpack.c.b16 %v249, %v248
    %314 = vmatpush.bf16.msra.mxu0 %v257
    %315 = vmatpush.bf16.msra.mxu0 %v256
    %316 = vmatpush.bf16.msra.mxu0 %v255
    %317 = vmatpush.bf16.msra.mxu0 %v254
    %318 = vmatpush.bf16.msra.mxu0 %v253
    %319 = vmatpush.bf16.msra.mxu0 %v252
    %320 = vmatpush.bf16.msra.mxu0 %v251
    %321 = vmatpush.bf16.msra.mxu0 %v250
    %322 = vmatmul.bf16.gmra.mxu0 %v114
    %v323 = vpop.f32.mrf.mxu0
    %v324 = vadd.f32 %v89, %v323
    %v325 = vpop.f32.mrf.mxu0
    %v326 = vadd.f32 %v89, %v325
    %327 = vdwg.mxu0
    %328 = vmatpush.bf16.msra.mxu0 %v265
    %329 = vmatpush.bf16.msra.mxu0 %v264
    %330 = vmatpush.bf16.msra.mxu0 %v263
    %331 = vmatpush.bf16.msra.mxu0 %v262
    %332 = vmatpush.bf16.msra.mxu0 %v261
    %333 = vmatpush.bf16.msra.mxu0 %v260
    %334 = vmatpush.bf16.msra.mxu0 %v259
    %335 = vmatpush.bf16.msra.mxu0 %v258
    %336 = vmatmul.bf16.gmra.mxu0 %v115
    %v337 = vpop.f32.mrf.mxu0
    %v338 = vadd.f32 %v324, %v337
    %v339 = vpop.f32.mrf.mxu0
    %v340 = vadd.f32 %v326, %v339
    %341 = vdwg.mxu0
    %342 = vmatpush.bf16.msra.mxu0 %v273
    %343 = vmatpush.bf16.msra.mxu0 %v272
    %344 = vmatpush.bf16.msra.mxu0 %v271
    %345 = vmatpush.bf16.msra.mxu0 %v270
    %346 = vmatpush.bf16.msra.mxu0 %v269
    %347 = vmatpush.bf16.msra.mxu0 %v268
    %348 = vmatpush.bf16.msra.mxu0 %v267
    %349 = vmatpush.bf16.msra.mxu0 %v266
    %350 = vmatmul.bf16.gmra.mxu0 %v116
    %v351 = vpop.f32.mrf.mxu0
    %v352 = vadd.f32 %v338, %v351
    %v353 = vpop.f32.mrf.mxu0
    %v354 = vadd.f32 %v340, %v353
    %355 = vdwg.mxu0
    %356 = vmatpush.bf16.msra.mxu0 %v281
    %357 = vmatpush.bf16.msra.mxu0 %v280
    %358 = vmatpush.bf16.msra.mxu0 %v279
    %359 = vmatpush.bf16.msra.mxu0 %v278
    %360 = vmatpush.bf16.msra.mxu0 %v277
    %361 = vmatpush.bf16.msra.mxu0 %v276
    %362 = vmatpush.bf16.msra.mxu0 %v275
    %363 = vmatpush.bf16.msra.mxu0 %v274
    %364 = vmatmul.bf16.gmra.mxu0 %v117
    %v365 = vpop.f32.mrf.mxu0
    %v366 = vadd.f32 %v352, %v365
    %v367 = vpop.f32.mrf.mxu0
    %v368 = vadd.f32 %v354, %v367
    %369 = vdwg.mxu0
    %vm370 = vcmask 48128
    %371 = vst.msk [vmem:[#allocation2] sm:$0xff] %vm370, %v366
    %372 = vst.msk [vmem:[#allocation2 + $0x8] sm:$0xff] %vm370, %v368
    // Predicated region
    $region14: #{citic_forward.9} parent=1 // pred_check
      _
    $region15: #{citic_forward.9} parent=1 // pred_check_branch
      %374 = sbr.rel (0) target = $region17
    $region16: #{citic_forward.9} parent=1 // pred_region
      %376 = vsyncadd [#allocation3], 224
      %s377 = sshll.u32 [#allocation2], 4
      %s378 = int_to_ptr.vmem [resolvable:$true] %s377
      %s379 = sshll.u32 %s3, 4
      %s380 = int_to_ptr.hbm [resolvable:$true] %s379
      %385 = dma.vmem_to_hbm [thread:$0]  %s378, 32, %s380, [#allocation3], 32, 32, 2
    $region17: #{citic_forward.9} parent=1 // pred_fallthru
      _
    // Predicated region
    $region18: #{citic_forward.9} parent=1 // pred_check
      _
    $region19: #{citic_forward.9} parent=1 // pred_check_branch
      %387 = sbr.rel (0) target = $region21
    $region20: #{citic_forward.9} parent=1 // pred_region
      %389 = dma.done [#allocation3], 256
    $region21: #{citic_forward.9} parent=1 // pred_fallthru
      _
    %390 = vsyncpa [#allocation3], 1

</llo_original>
